<compile_context>
chip_gen: v5e
topology: v5e:2x2
jax: 0.10.0
libtpu: 0.0.40
codegen_flags: <defaults>
</compile_context>

<pallas_src>
import jax
import jax.numpy as jnp
from jax import lax
from jax.experimental import pallas as pl
from jax.experimental.pallas import tpu as pltpu


# --------------------------------------------------------------------------- #
# Pass 1: conv matmuls + per-channel partial moments                           #
# --------------------------------------------------------------------------- #
def make_conv_stats_kernel(K, MT, tap_offsets):
    def kernel(x_ref, w_ref, y_ref, sum_ref, sumsq_ref):
        # x_ref:   (1, R, Cin)   bf16   (R = padded rows for one batch element)
        # w_ref:   (K, Cin, Cout) bf16
        # y_ref:   (1, MT, Cout) f32    (MT = T_out * V)
        # sum_ref / sumsq_ref: (1, Cout) f32  -- resident accumulators
        acc = None
        for k in range(K):  # small static K -> unrolled MXU matmuls
            off = tap_offsets[k]
            xk = x_ref[0, off:off + MT, :]                       # (MT, Cin) bf16
            pk = jnp.dot(xk, w_ref[k], preferred_element_type=jnp.float32)
            acc = pk if acc is None else acc + pk                # (MT, Cout) f32

        y_ref[0] = acc

        @pl.when(pl.program_id(0) == 0)
        def _():
            sum_ref[...] = jnp.zeros_like(sum_ref)
            sumsq_ref[...] = jnp.zeros_like(sumsq_ref)

        sum_ref[...] = sum_ref[...] + jnp.sum(acc, axis=0, keepdims=True)
        sumsq_ref[...] = sumsq_ref[...] + jnp.sum(acc * acc, axis=0, keepdims=True)

    return kernel


# --------------------------------------------------------------------------- #
# Pass 2: apply BN affine (single FMA per element)                             #
# --------------------------------------------------------------------------- #
def bn_apply_kernel(y_ref, scale_ref, shift_ref, o_ref):
    # y_ref: (TILE_M, Cout) f32; scale/shift: (1, Cout) f32
    o_ref[...] = (y_ref[...] * scale_ref[...] + shift_ref[...]).astype(o_ref.dtype)


# --------------------------------------------------------------------------- #
# Wrapper                                                                      #
# --------------------------------------------------------------------------- #
def temporal_conv(x_nchw, weight, bias, gamma, beta, *, stride=1, dilation=1,
                  eps=1e-5):
    """x_nchw: (N, Cin, T, V); weight: (Cout, Cin, K, 1) as in nn.Conv2d."""
    N, Cin, T, V = x_nchw.shape
    Cout, _, K, _ = weight.shape
    pad = (K + (K - 1) * (dilation - 1) - 1) // 2
    T_out = (T + 2 * pad - dilation * (K - 1) - 1) // stride + 1
    MT = T_out * V
    M = N * MT

    # --- glue: channels-last, zero-pad time, flatten (T, V) rows ------------- #
    x_t = jnp.transpose(x_nchw, (0, 2, 3, 1))                    # (N, T, V, Cin)
    x_p = jnp.pad(x_t, ((0, 0), (pad, pad), (0, 0), (0, 0)))     # (N, T_pad, V, Cin)

    if stride == 1:
        # Single copy of the activation; taps are overlapping row windows.
        x_rows = x_p.reshape(N, -1, Cin)                         # (N, T_pad*V, Cin)
        tap_offsets = tuple(k * dilation * V for k in range(K))
    else:
        # TODO(synk): stride>1 uses a tap-gathered layout (K-fold duplication).
        taps = []
        for k in range(K):
            start = k * dilation
            tap = lax.slice(
                x_p,
                (0, start, 0, 0),
                (N, start + (T_out - 1) * stride + 1, V, Cin),
                (1, stride, 1, 1),
            )                                                    # (N, T_out, V, Cin)
            taps.append(tap.reshape(N, MT, Cin))
        x_rows = jnp.concatenate(taps, axis=1)                   # (N, K*MT, Cin)
        tap_offsets = tuple(k * MT for k in range(K))

    R = x_rows.shape[1]
    x_rows = x_rows.astype(jnp.bfloat16)                         # bf16 MXU inputs
    w = jnp.transpose(weight[..., 0], (2, 1, 0)).astype(jnp.bfloat16)  # (K, Cin, Cout)
    # Conv bias is intentionally unused: it cancels exactly in training-mode BN.
    del bias

    # --- pass 1: conv + partial moments -------------------------------------- #
    y, ssum, ssq = pl.pallas_call(
        make_conv_stats_kernel(K, MT, tap_offsets),
        out_shape=(
            jax.ShapeDtypeStruct((N, MT, Cout), jnp.float32),
            jax.ShapeDtypeStruct((1, Cout), jnp.float32),
            jax.ShapeDtypeStruct((1, Cout), jnp.float32),
        ),
        grid=(N,),
        in_specs=[
            pl.BlockSpec((1, R, Cin), lambda n: (n, 0, 0)),
            pl.BlockSpec((K, Cin, Cout), lambda n: (0, 0, 0)),
        ],
        out_specs=(
            pl.BlockSpec((1, MT, Cout), lambda n: (n, 0, 0)),
            pl.BlockSpec((1, Cout), lambda n: (0, 0)),
            pl.BlockSpec((1, Cout), lambda n: (0, 0)),
        ),
        compiler_params=pltpu.CompilerParams(
            dimension_semantics=("arbitrary",)),   # stats accumulate across grid
    )(x_rows, w)

    # --- tiny O(Cout) finalize of the moments (pure JAX glue) ----------------- #
    # Note: E[x^2] - E[x]^2 in f32; fine at these scales (see review concern).
    mean = ssum / M
    var = jnp.maximum(ssq / M - mean * mean, 0.0)
    scale = gamma.reshape(1, Cout).astype(jnp.float32) * lax.rsqrt(var + eps)
    shift = beta.reshape(1, Cout).astype(jnp.float32) - mean * scale

    # --- pass 2: normalize, tiled over M with pipelined DMA ------------------- #
    y2 = y.reshape(M, Cout)
    TILE_M = M if M <= 1024 else 1024                            # multiple of 8 when tiled
    out = pl.pallas_call(
        bn_apply_kernel,
        out_shape=jax.ShapeDtypeStruct((M, Cout), jnp.float32),
        grid=(pl.cdiv(M, TILE_M),),
        in_specs=[
            pl.BlockSpec((TILE_M, Cout), lambda i: (i, 0)),
            pl.BlockSpec((1, Cout), lambda i: (0, 0)),
            pl.BlockSpec((1, Cout), lambda i: (0, 0)),
        ],
        out_specs=pl.BlockSpec((TILE_M, Cout), lambda i: (i, 0)),
        compiler_params=pltpu.CompilerParams(
            dimension_semantics=("parallel",)),
    )(y2, scale, shift)

    out = out.reshape(N, T_out, V, Cout)
    return jnp.transpose(out, (0, 3, 1, 2))                      # back to NCHW


# --------------------------------------------------------------------------- #
# Pure-JAX reference mirroring the PyTorch forward (training-mode BN)          #
# --------------------------------------------------------------------------- #
def reference(x, weight, bias, gamma, beta, *, stride=1, dilation=1):
    K = weight.shape[2]
    pad = (K + (K - 1) * (dilation - 1) - 1) // 2
    y = lax.conv_general_dilated(
        x, weight,
        window_strides=(stride, 1),
        padding=((pad, pad), (0, 0)),
        rhs_dilation=(dilation, 1),
        dimension_numbers=("NCHW", "OIHW", "NCHW"),
    )
    y = y + bias.reshape(1, -1, 1, 1)
    mean = jnp.mean(y, axis=(0, 2, 3), keepdims=True)
    var = jnp.mean((y - mean) ** 2, axis=(0, 2, 3), keepdims=True)
    y = (y - mean) * lax.rsqrt(var + 1e-5)
    return y * gamma.reshape(1, -1, 1, 1) + beta.reshape(1, -1, 1, 1)


if __name__ == "__main__":
    # Small deterministic config: N=2, Cin=4, T=16, V=16, Cout=8, kernel_size=3
    N, Cin, T, V = 2, 4, 16, 16
    Cout, K = 8, 3
    stride, dilation = 1, 1

    key = jax.random.PRNGKey(0)
    kx, kw, kb, kg, kbeta = jax.random.split(key, 5)
    x = jax.random.normal(kx, (N, Cin, T, V), dtype=jnp.float32)
    weight = 0.1 * jax.random.normal(kw, (Cout, Cin, K, 1), dtype=jnp.float32)
    bias = 0.05 * jax.random.normal(kb, (Cout,), dtype=jnp.float32)
    gamma = 1.0 + 0.1 * jax.random.normal(kg, (Cout,), dtype=jnp.float32)
    beta = 0.1 * jax.random.normal(kbeta, (Cout,), dtype=jnp.float32)

    fn = jax.jit(lambda a, w, b, g, bt: temporal_conv(
        a, w, b, g, bt, stride=stride, dilation=dilation))
    y = jax.block_until_ready(fn(x, weight, bias, gamma, beta))

    y_ref = reference(x, weight, bias, gamma, beta, stride=stride, dilation=dilation)
    assert y.shape == y_ref.shape, (y.shape, y_ref.shape)
    # Tolerance sized for bf16 MXU inputs (f32 accumulation / f32 BN stats).
    assert jnp.allclose(y, y_ref, atol=2e-2, rtol=2e-2), \
        float(jnp.max(jnp.abs(y - y_ref)))

    print("KERNEL_OK")
</pallas_src>

<mosaic_0001>
module attributes {stable_mosaic.version = 11 : i64} {
  func.func @kernel(%arg0: i32, %arg1: memref<1x288x4xbf16, #tpu.memory_space<vmem>>, %arg2: memref<3x4x8xbf16, #tpu.memory_space<vmem>>, %arg3: memref<1x256x8xf32, #tpu.memory_space<vmem>>, %arg4: memref<1x8xf32, #tpu.memory_space<vmem>>, %arg5: memref<1x8xf32, #tpu.memory_space<vmem>>) attributes {dimension_semantics = [#tpu.dimension_semantics<arbitrary>], iteration_bounds = array<i64: 2>, scalar_prefetch = 0 : i64, scratch_operands = 0 : i64, tpu.core_type = #tpu.core_type<tc>, window_params = [{transform_indices = @transform_0, window_bounds = array<i64: 1, 288, 4>}, {pipeline_mode = #tpu.pipeline_mode<synchronous>, transform_indices = @transform_1, window_bounds = array<i64: 3, 4, 8>}, {transform_indices = @transform_2, window_bounds = array<i64: 1, 256, 8>}, {pipeline_mode = #tpu.pipeline_mode<synchronous>, transform_indices = @transform_3, window_bounds = array<i64: 1, 8>}, {pipeline_mode = #tpu.pipeline_mode<synchronous>, transform_indices = @transform_4, window_bounds = array<i64: 1, 8>}]} {
    %c0 = arith.constant 0 : index
    %c0_0 = arith.constant 0 : index
    %c0_1 = arith.constant 0 : index
    %0 = vector.load %arg1[%c0, %c0_0, %c0_1] : memref<1x288x4xbf16, #tpu.memory_space<vmem>>, vector<1x256x4xbf16>
    %1 = vector.shape_cast %0 : vector<1x256x4xbf16> to vector<256x4xbf16>
    %c0_2 = arith.constant 0 : index
    %c0_3 = arith.constant 0 : index
    %c0_4 = arith.constant 0 : index
    %2 = vector.load %arg2[%c0_2, %c0_3, %c0_4] : memref<3x4x8xbf16, #tpu.memory_space<vmem>>, vector<1x4x8xbf16>
    %3 = vector.shape_cast %2 : vector<1x4x8xbf16> to vector<4x8xbf16>
    %cst = arith.constant dense<0.000000e+00> : vector<256x8xf32>
    %4 = tpu.matmul %1, %3, %cst {dimension_numbers = #tpu.dot_dimension_numbers<[1], [0], [0], [1], [0, 0, 1, 1], [], []>} : vector<256x4xbf16>, vector<4x8xbf16>, vector<256x8xf32> -> vector<256x8xf32>
    %c0_5 = arith.constant 0 : index
    %c16 = arith.constant 16 : index
    %c0_6 = arith.constant 0 : index
    %5 = vector.load %arg1[%c0_5, %c16, %c0_6] : memref<1x288x4xbf16, #tpu.memory_space<vmem>>, vector<1x256x4xbf16>
    %6 = vector.shape_cast %5 : vector<1x256x4xbf16> to vector<256x4xbf16>
    %c1 = arith.constant 1 : index
    %c0_7 = arith.constant 0 : index
    %c0_8 = arith.constant 0 : index
    %7 = vector.load %arg2[%c1, %c0_7, %c0_8] : memref<3x4x8xbf16, #tpu.memory_space<vmem>>, vector<1x4x8xbf16>
    %8 = vector.shape_cast %7 : vector<1x4x8xbf16> to vector<4x8xbf16>
    %cst_9 = arith.constant dense<0.000000e+00> : vector<256x8xf32>
    %9 = tpu.matmul %6, %8, %cst_9 {dimension_numbers = #tpu.dot_dimension_numbers<[1], [0], [0], [1], [0, 0, 1, 1], [], []>} : vector<256x4xbf16>, vector<4x8xbf16>, vector<256x8xf32> -> vector<256x8xf32>
    %10 = arith.addf %4, %9 : vector<256x8xf32>
    %c0_10 = arith.constant 0 : index
    %c32 = arith.constant 32 : index
    %c0_11 = arith.constant 0 : index
    %11 = vector.load %arg1[%c0_10, %c32, %c0_11] : memref<1x288x4xbf16, #tpu.memory_space<vmem>>, vector<1x256x4xbf16>
    %12 = vector.shape_cast %11 : vector<1x256x4xbf16> to vector<256x4xbf16>
    %c2 = arith.constant 2 : index
    %c0_12 = arith.constant 0 : index
    %c0_13 = arith.constant 0 : index
    %13 = vector.load %arg2[%c2, %c0_12, %c0_13] : memref<3x4x8xbf16, #tpu.memory_space<vmem>>, vector<1x4x8xbf16>
    %14 = vector.shape_cast %13 : vector<1x4x8xbf16> to vector<4x8xbf16>
    %cst_14 = arith.constant dense<0.000000e+00> : vector<256x8xf32>
    %15 = tpu.matmul %12, %14, %cst_14 {dimension_numbers = #tpu.dot_dimension_numbers<[1], [0], [0], [1], [0, 0, 1, 1], [], []>} : vector<256x4xbf16>, vector<4x8xbf16>, vector<256x8xf32> -> vector<256x8xf32>
    %16 = arith.addf %10, %15 : vector<256x8xf32>
    %c0_15 = arith.constant 0 : index
    %c0_16 = arith.constant 0 : index
    %c0_17 = arith.constant 0 : index
    %17 = vector.load %arg3[%c0_15, %c0_16, %c0_17] : memref<1x256x8xf32, #tpu.memory_space<vmem>>, vector<1x256x8xf32>
    %18 = vector.shape_cast %17 : vector<1x256x8xf32> to vector<256x8xf32>
    %19 = vector.shape_cast %16 : vector<256x8xf32> to vector<1x256x8xf32>
    tpu.vector_store %arg3[%c0_15, %c0_16, %c0_17], %19 {strides = array<i32>} : memref<1x256x8xf32, #tpu.memory_space<vmem>>, vector<1x256x8xf32>,
    %c0_i32 = arith.constant 0 : i32
    %20 = arith.cmpi eq, %arg0, %c0_i32 : i32
    %21 = arith.extui %20 : i1 to i32
    %c0_i32_18 = arith.constant 0 : i32
    %22 = arith.cmpi ne, %21, %c0_i32_18 : i32
    scf.if %22 {
      %cst_29 = arith.constant 0.000000e+00 : f32
      %34 = vector.broadcast %cst_29 : f32 to vector<1x8xf32>
      %c0_30 = arith.constant 0 : index
      %c0_31 = arith.constant 0 : index
      %35 = vector.load %arg4[%c0_30, %c0_31] : memref<1x8xf32, #tpu.memory_space<vmem>>, vector<1x8xf32>
      tpu.vector_store %arg4[%c0_30, %c0_31], %34 {strides = array<i32>} : memref<1x8xf32, #tpu.memory_space<vmem>>, vector<1x8xf32>,
      %cst_32 = arith.constant 0.000000e+00 : f32
      %36 = vector.broadcast %cst_32 : f32 to vector<1x8xf32>
      %c0_33 = arith.constant 0 : index
      %c0_34 = arith.constant 0 : index
      %37 = vector.load %arg5[%c0_33, %c0_34] : memref<1x8xf32, #tpu.memory_space<vmem>>, vector<1x8xf32>
      tpu.vector_store %arg5[%c0_33, %c0_34], %36 {strides = array<i32>} : memref<1x8xf32, #tpu.memory_space<vmem>>, vector<1x8xf32>,
    } else {
    }
    %c0_19 = arith.constant 0 : index
    %c0_20 = arith.constant 0 : index
    %23 = vector.load %arg4[%c0_19, %c0_20] : memref<1x8xf32, #tpu.memory_space<vmem>>, vector<1x8xf32>
    %cst_21 = arith.constant dense<0.000000e+00> : vector<8xf32>
    %24 = vector.multi_reduction <add>, %16, %cst_21 [0] : vector<256x8xf32> to vector<8xf32>
    %25 = vector.shape_cast %24 : vector<8xf32> to vector<1x8xf32>
    %26 = arith.addf %23, %25 : vector<1x8xf32>
    %c0_22 = arith.constant 0 : index
    %c0_23 = arith.constant 0 : index
    %27 = vector.load %arg4[%c0_22, %c0_23] : memref<1x8xf32, #tpu.memory_space<vmem>>, vector<1x8xf32>
    tpu.vector_store %arg4[%c0_22, %c0_23], %26 {strides = array<i32>} : memref<1x8xf32, #tpu.memory_space<vmem>>, vector<1x8xf32>,
    %c0_24 = arith.constant 0 : index
    %c0_25 = arith.constant 0 : index
    %28 = vector.load %arg5[%c0_24, %c0_25] : memref<1x8xf32, #tpu.memory_space<vmem>>, vector<1x8xf32>
    %29 = arith.mulf %16, %16 : vector<256x8xf32>
    %cst_26 = arith.constant dense<0.000000e+00> : vector<8xf32>
    %30 = vector.multi_reduction <add>, %29, %cst_26 [0] : vector<256x8xf32> to vector<8xf32>
    %31 = vector.shape_cast %30 : vector<8xf32> to vector<1x8xf32>
    %32 = arith.addf %28, %31 : vector<1x8xf32>
    %c0_27 = arith.constant 0 : index
    %c0_28 = arith.constant 0 : index
    %33 = vector.load %arg5[%c0_27, %c0_28] : memref<1x8xf32, #tpu.memory_space<vmem>>, vector<1x8xf32>
    tpu.vector_store %arg5[%c0_27, %c0_28], %32 {strides = array<i32>} : memref<1x8xf32, #tpu.memory_space<vmem>>, vector<1x8xf32>,
    return
  }
  func.func @transform_0(%arg0: i32) -> (i32, i32, i32) {
    %c0_i32 = arith.constant 0 : i32
    %c0_i32_0 = arith.constant 0 : i32
    %c0_i32_1 = arith.constant 0 : i32
    return %arg0, %c0_i32, %c0_i32_0 : i32, i32, i32
  }
  func.func @transform_1(%arg0: i32) -> (i32, i32, i32) {
    %c0_i32 = arith.constant 0 : i32
    %c0_i32_0 = arith.constant 0 : i32
    %c0_i32_1 = arith.constant 0 : i32
    %c0_i32_2 = arith.constant 0 : i32
    return %c0_i32, %c0_i32_0, %c0_i32_1 : i32, i32, i32
  }
  func.func @transform_2(%arg0: i32) -> (i32, i32, i32) {
    %c0_i32 = arith.constant 0 : i32
    %c0_i32_0 = arith.constant 0 : i32
    %c0_i32_1 = arith.constant 0 : i32
    return %arg0, %c0_i32, %c0_i32_0 : i32, i32, i32
  }
  func.func @transform_3(%arg0: i32) -> (i32, i32) {
    %c0_i32 = arith.constant 0 : i32
    %c0_i32_0 = arith.constant 0 : i32
    %c0_i32_1 = arith.constant 0 : i32
    return %c0_i32, %c0_i32_0 : i32, i32
  }
  func.func @transform_4(%arg0: i32) -> (i32, i32) {
    %c0_i32 = arith.constant 0 : i32
    %c0_i32_0 = arith.constant 0 : i32
    %c0_i32_1 = arith.constant 0 : i32
    return %c0_i32, %c0_i32_0 : i32, i32
  }
}

module attributes {stable_mosaic.version = 11 : i64} {
  func.func @bn_apply_kernel(%arg0: i32, %arg1: memref<512x8xf32, #tpu.memory_space<vmem>>, %arg2: memref<1x8xf32, #tpu.memory_space<vmem>>, %arg3: memref<1x8xf32, #tpu.memory_space<vmem>>, %arg4: memref<512x8xf32, #tpu.memory_space<vmem>>) attributes {dimension_semantics = [#tpu.dimension_semantics<parallel>], iteration_bounds = array<i64: 1>, scalar_prefetch = 0 : i64, scratch_operands = 0 : i64, tpu.core_type = #tpu.core_type<tc>, window_params = [{transform_indices = @transform_0, window_bounds = array<i64: 512, 8>}, {pipeline_mode = #tpu.pipeline_mode<synchronous>, transform_indices = @transform_1, window_bounds = array<i64: 1, 8>}, {pipeline_mode = #tpu.pipeline_mode<synchronous>, transform_indices = @transform_2, window_bounds = array<i64: 1, 8>}, {transform_indices = @transform_3, window_bounds = array<i64: 512, 8>}]} {
    %c0 = arith.constant 0 : index
    %c0_0 = arith.constant 0 : index
    %0 = vector.load %arg1[%c0, %c0_0] : memref<512x8xf32, #tpu.memory_space<vmem>>, vector<512x8xf32>
    %c0_1 = arith.constant 0 : index
    %c0_2 = arith.constant 0 : index
    %1 = vector.load %arg2[%c0_1, %c0_2] : memref<1x8xf32, #tpu.memory_space<vmem>>, vector<1x8xf32>
    %2 = vector.broadcast %1 : vector<1x8xf32> to vector<512x8xf32>
    %3 = arith.mulf %0, %2 : vector<512x8xf32>
    %c0_3 = arith.constant 0 : index
    %c0_4 = arith.constant 0 : index
    %4 = vector.load %arg3[%c0_3, %c0_4] : memref<1x8xf32, #tpu.memory_space<vmem>>, vector<1x8xf32>
    %5 = vector.broadcast %4 : vector<1x8xf32> to vector<512x8xf32>
    %6 = arith.addf %3, %5 : vector<512x8xf32>
    %c0_5 = arith.constant 0 : index
    %c0_6 = arith.constant 0 : index
    %7 = vector.load %arg4[%c0_5, %c0_6] : memref<512x8xf32, #tpu.memory_space<vmem>>, vector<512x8xf32>
    tpu.vector_store %arg4[%c0_5, %c0_6], %6 {strides = array<i32>} : memref<512x8xf32, #tpu.memory_space<vmem>>, vector<512x8xf32>,
    return
  }
  func.func @transform_0(%arg0: i32) -> (i32, i32) {
    %c0_i32 = arith.constant 0 : i32
    %c0_i32_0 = arith.constant 0 : i32
    return %arg0, %c0_i32 : i32, i32
  }
  func.func @transform_1(%arg0: i32) -> (i32, i32) {
    %c0_i32 = arith.constant 0 : i32
    %c0_i32_0 = arith.constant 0 : i32
    %c0_i32_1 = arith.constant 0 : i32
    return %c0_i32, %c0_i32_0 : i32, i32
  }
  func.func @transform_2(%arg0: i32) -> (i32, i32) {
    %c0_i32 = arith.constant 0 : i32
    %c0_i32_0 = arith.constant 0 : i32
    %c0_i32_1 = arith.constant 0 : i32
    return %c0_i32, %c0_i32_0 : i32, i32
  }
  func.func @transform_3(%arg0: i32) -> (i32, i32) {
    %c0_i32 = arith.constant 0 : i32
    %c0_i32_0 = arith.constant 0 : i32
    return %arg0, %c0_i32 : i32, i32
  }
}

</mosaic_0001>

<llo_original>
// kernel: _lambda_.3
$region0: #{_lambda_.3}
  #allocation0 [shape = 'u32[]', space=smem, size = 0x4, offset = 0x4, fixed_abs, tag = 'smem constant byte address 0x4 - core index']
  #allocation1 [shape = 'u32[72,128]{1,0:T(1,128)}', space=vmem, size = 0x9000, scoped, tag = 'internal scratch']
  %s0 = inlined_call_operand.vmem [shape: f32[512,8], index: 0, kind: input, shape index: {}]
  %s1 = inlined_call_operand.vmem [shape: f32[1,8], index: 1, kind: input, shape index: {}]
  %s2 = inlined_call_operand.vmem [shape: f32[1,8], index: 2, kind: input, shape index: {}]
  %s3 = inlined_call_operand.vmem [shape: f32[512,8], index: 3, kind: output, shape index: {}]
  %s4 = sld [smem:[#allocation0]]
  $region22: #{_lambda_.3} parent=0
    _
  %s6 = ssub.s32 1, %s4
  %s7 = scalar_select 0, %s6, %s4
  // Predicated region
  $region2: #{_lambda_.3} parent=0 // pred_check
    _
  $region3: #{_lambda_.3} parent=0 // pred_check_branch
    %9 = sbr.rel (0) target = $region5
  $region4: #{_lambda_.3} parent=0 // pred_region
    _
  $region5: #{_lambda_.3} parent=0 // pred_fallthru
    _
  // Predicated region
  $region6: #{_lambda_.3} parent=0 // pred_check
    _
  $region7: #{_lambda_.3} parent=0 // pred_check_branch
    %11 = sbr.rel (0) target = $region9
  $region8: #{_lambda_.3} parent=0 // pred_region
    _
  $region9: #{_lambda_.3} parent=0 // pred_fallthru
    _
  // Predicated region
  $region10: #{_lambda_.3} parent=0 // pred_check
    _
  $region11: #{_lambda_.3} parent=0 // pred_check_branch
    %13 = sbr.rel (0) target = $region13
  $region12: #{_lambda_.3} parent=0 // pred_region
    _
  $region13: #{_lambda_.3} parent=0 // pred_fallthru
    _
  %v14 = vld [vmem:[%s0] sm:$0xff]
  %v15 = vld [vmem:[%s0 + $0x8] sm:$0xff]
  %v16 = vld [vmem:[%s0 + $0x10] sm:$0xff]
  %v17 = vld [vmem:[%s0 + $0x18] sm:$0xff]
  %v18 = vld [vmem:[%s0 + $0x20] sm:$0xff]
  %v19 = vld [vmem:[%s0 + $0x28] sm:$0xff]
  %v20 = vld [vmem:[%s0 + $0x30] sm:$0xff]
  %v21 = vld [vmem:[%s0 + $0x38] sm:$0xff]
  %v22 = vld [vmem:[%s0 + $0x40] sm:$0xff]
  %v23 = vld [vmem:[%s0 + $0x48] sm:$0xff]
  %v24 = vld [vmem:[%s0 + $0x50] sm:$0xff]
  %v25 = vld [vmem:[%s0 + $0x58] sm:$0xff]
  %v26 = vld [vmem:[%s0 + $0x60] sm:$0xff]
  %v27 = vld [vmem:[%s0 + $0x68] sm:$0xff]
  %v28 = vld [vmem:[%s0 + $0x70] sm:$0xff]
  %v29 = vld [vmem:[%s0 + $0x78] sm:$0xff]
  %v30 = vld [vmem:[%s0 + $0x80] sm:$0xff]
  %v31 = vld [vmem:[%s0 + $0x88] sm:$0xff]
  %v32 = vld [vmem:[%s0 + $0x90] sm:$0xff]
  %v33 = vld [vmem:[%s0 + $0x98] sm:$0xff]
  %v34 = vld [vmem:[%s0 + $0xa0] sm:$0xff]
  %v35 = vld [vmem:[%s0 + $0xa8] sm:$0xff]
  %v36 = vld [vmem:[%s0 + $0xb0] sm:$0xff]
  %v37 = vld [vmem:[%s0 + $0xb8] sm:$0xff]
  %v38 = vld [vmem:[%s0 + $0xc0] sm:$0xff]
  %v39 = vld [vmem:[%s0 + $0xc8] sm:$0xff]
  %v40 = vld [vmem:[%s0 + $0xd0] sm:$0xff]
  %v41 = vld [vmem:[%s0 + $0xd8] sm:$0xff]
  %v42 = vld [vmem:[%s0 + $0xe0] sm:$0xff]
  %v43 = vld [vmem:[%s0 + $0xe8] sm:$0xff]
  %v44 = vld [vmem:[%s0 + $0xf0] sm:$0xff]
  %v45 = vld [vmem:[%s0 + $0xf8] sm:$0xff]
  %v46 = vld [vmem:[%s0 + $0x100] sm:$0xff]
  %v47 = vld [vmem:[%s0 + $0x108] sm:$0xff]
  %v48 = vld [vmem:[%s0 + $0x110] sm:$0xff]
  %v49 = vld [vmem:[%s0 + $0x118] sm:$0xff]
  %v50 = vld [vmem:[%s0 + $0x120] sm:$0xff]
  %v51 = vld [vmem:[%s0 + $0x128] sm:$0xff]
  %v52 = vld [vmem:[%s0 + $0x130] sm:$0xff]
  %v53 = vld [vmem:[%s0 + $0x138] sm:$0xff]
  %v54 = vld [vmem:[%s0 + $0x140] sm:$0xff]
  %v55 = vld [vmem:[%s0 + $0x148] sm:$0xff]
  %v56 = vld [vmem:[%s0 + $0x150] sm:$0xff]
  %v57 = vld [vmem:[%s0 + $0x158] sm:$0xff]
  %v58 = vld [vmem:[%s0 + $0x160] sm:$0xff]
  %v59 = vld [vmem:[%s0 + $0x168] sm:$0xff]
  %v60 = vld [vmem:[%s0 + $0x170] sm:$0xff]
  %v61 = vld [vmem:[%s0 + $0x178] sm:$0xff]
  %v62 = vld [vmem:[%s0 + $0x180] sm:$0xff]
  %v63 = vld [vmem:[%s0 + $0x188] sm:$0xff]
  %v64 = vld [vmem:[%s0 + $0x190] sm:$0xff]
  %v65 = vld [vmem:[%s0 + $0x198] sm:$0xff]
  %v66 = vld [vmem:[%s0 + $0x1a0] sm:$0xff]
  %v67 = vld [vmem:[%s0 + $0x1a8] sm:$0xff]
  %v68 = vld [vmem:[%s0 + $0x1b0] sm:$0xff]
  %v69 = vld [vmem:[%s0 + $0x1b8] sm:$0xff]
  %v70 = vld [vmem:[%s0 + $0x1c0] sm:$0xff]
  %v71 = vld [vmem:[%s0 + $0x1c8] sm:$0xff]
  %v72 = vld [vmem:[%s0 + $0x1d0] sm:$0xff]
  %v73 = vld [vmem:[%s0 + $0x1d8] sm:$0xff]
  %v74 = vld [vmem:[%s0 + $0x1e0] sm:$0xff]
  %v75 = vld [vmem:[%s0 + $0x1e8] sm:$0xff]
  %v76 = vld [vmem:[%s0 + $0x1f0] sm:$0xff]
  %v77 = vld [vmem:[%s0 + $0x1f8] sm:$0xff]
  %v78 = vld [vmem:[%s1] sm:$0x1]
  %v80 = vperm.slane %v78, 0
  %v82 = vmul.f32 %v14, %v80
  %v83 = vmul.f32 %v15, %v80
  %v84 = vmul.f32 %v16, %v80
  %v85 = vmul.f32 %v17, %v80
  %v86 = vmul.f32 %v18, %v80
  %v87 = vmul.f32 %v19, %v80
  %v88 = vmul.f32 %v20, %v80
  %v89 = vmul.f32 %v21, %v80
  %v90 = vmul.f32 %v22, %v80
  %v91 = vmul.f32 %v23, %v80
  %v92 = vmul.f32 %v24, %v80
  %v93 = vmul.f32 %v25, %v80
  %v94 = vmul.f32 %v26, %v80
  %v95 = vmul.f32 %v27, %v80
  %v96 = vmul.f32 %v28, %v80
  %v97 = vmul.f32 %v29, %v80
  %v98 = vmul.f32 %v30, %v80
  %v99 = vmul.f32 %v31, %v80
  %v100 = vmul.f32 %v32, %v80
  %v101 = vmul.f32 %v33, %v80
  %v102 = vmul.f32 %v34, %v80
  %v103 = vmul.f32 %v35, %v80
  %v104 = vmul.f32 %v36, %v80
  %v105 = vmul.f32 %v37, %v80
  %v106 = vmul.f32 %v38, %v80
  %v107 = vmul.f32 %v39, %v80
  %v108 = vmul.f32 %v40, %v80
  %v109 = vmul.f32 %v41, %v80
  %v110 = vmul.f32 %v42, %v80
  %v111 = vmul.f32 %v43, %v80
  %v112 = vmul.f32 %v44, %v80
  %v113 = vmul.f32 %v45, %v80
  %v114 = vmul.f32 %v46, %v80
  %v115 = vmul.f32 %v47, %v80
  %v116 = vmul.f32 %v48, %v80
  %v117 = vmul.f32 %v49, %v80
  %v118 = vmul.f32 %v50, %v80
  %v119 = vmul.f32 %v51, %v80
  %v120 = vmul.f32 %v52, %v80
  %v121 = vmul.f32 %v53, %v80
  %v122 = vmul.f32 %v54, %v80
  %v123 = vmul.f32 %v55, %v80
  %v124 = vmul.f32 %v56, %v80
  %v125 = vmul.f32 %v57, %v80
  %v126 = vmul.f32 %v58, %v80
  %v127 = vmul.f32 %v59, %v80
  %v128 = vmul.f32 %v60, %v80
  %v129 = vmul.f32 %v61, %v80
  %v130 = vmul.f32 %v62, %v80
  %v131 = vmul.f32 %v63, %v80
  %v132 = vmul.f32 %v64, %v80
  %v133 = vmul.f32 %v65, %v80
  %v134 = vmul.f32 %v66, %v80
  %v135 = vmul.f32 %v67, %v80
  %v136 = vmul.f32 %v68, %v80
  %v137 = vmul.f32 %v69, %v80
  %v138 = vmul.f32 %v70, %v80
  %v139 = vmul.f32 %v71, %v80
  %v140 = vmul.f32 %v72, %v80
  %v141 = vmul.f32 %v73, %v80
  %v142 = vmul.f32 %v74, %v80
  %v143 = vmul.f32 %v75, %v80
  %v144 = vmul.f32 %v76, %v80
  %v145 = vmul.f32 %v77, %v80
  %v146 = vld [vmem:[%s2] sm:$0x1]
  %v148 = vperm.slane %v146, 0
  %v150 = vadd.f32 %v82, %v148
  %v151 = vadd.f32 %v83, %v148
  %v152 = vadd.f32 %v84, %v148
  %v153 = vadd.f32 %v85, %v148
  %v154 = vadd.f32 %v86, %v148
  %v155 = vadd.f32 %v87, %v148
  %v156 = vadd.f32 %v88, %v148
  %v157 = vadd.f32 %v89, %v148
  %v158 = vadd.f32 %v90, %v148
  %v159 = vadd.f32 %v91, %v148
  %v160 = vadd.f32 %v92, %v148
  %v161 = vadd.f32 %v93, %v148
  %v162 = vadd.f32 %v94, %v148
  %v163 = vadd.f32 %v95, %v148
  %v164 = vadd.f32 %v96, %v148
  %v165 = vadd.f32 %v97, %v148
  %v166 = vadd.f32 %v98, %v148
  %v167 = vadd.f32 %v99, %v148
  %v168 = vadd.f32 %v100, %v148
  %v169 = vadd.f32 %v101, %v148
  %v170 = vadd.f32 %v102, %v148
  %v171 = vadd.f32 %v103, %v148
  %v172 = vadd.f32 %v104, %v148
  %v173 = vadd.f32 %v105, %v148
  %v174 = vadd.f32 %v106, %v148
  %v175 = vadd.f32 %v107, %v148
  %v176 = vadd.f32 %v108, %v148
  %v177 = vadd.f32 %v109, %v148
  %v178 = vadd.f32 %v110, %v148
  %v179 = vadd.f32 %v111, %v148
  %v180 = vadd.f32 %v112, %v148
  %v181 = vadd.f32 %v113, %v148
  %v182 = vadd.f32 %v114, %v148
  %v183 = vadd.f32 %v115, %v148
  %v184 = vadd.f32 %v116, %v148
  %v185 = vadd.f32 %v117, %v148
  %v186 = vadd.f32 %v118, %v148
  %v187 = vadd.f32 %v119, %v148
  %v188 = vadd.f32 %v120, %v148
  %v189 = vadd.f32 %v121, %v148
  %v190 = vadd.f32 %v122, %v148
  %v191 = vadd.f32 %v123, %v148
  %v192 = vadd.f32 %v124, %v148
  %v193 = vadd.f32 %v125, %v148
  %v194 = vadd.f32 %v126, %v148
  %v195 = vadd.f32 %v127, %v148
  %v196 = vadd.f32 %v128, %v148
  %v197 = vadd.f32 %v129, %v148
  %v198 = vadd.f32 %v130, %v148
  %v199 = vadd.f32 %v131, %v148
  %v200 = vadd.f32 %v132, %v148
  %v201 = vadd.f32 %v133, %v148
  %v202 = vadd.f32 %v134, %v148
  %v203 = vadd.f32 %v135, %v148
  %v204 = vadd.f32 %v136, %v148
  %v205 = vadd.f32 %v137, %v148
  %v206 = vadd.f32 %v138, %v148
  %v207 = vadd.f32 %v139, %v148
  %v208 = vadd.f32 %v140, %v148
  %v209 = vadd.f32 %v141, %v148
  %v210 = vadd.f32 %v142, %v148
  %v211 = vadd.f32 %v143, %v148
  %v212 = vadd.f32 %v144, %v148
  %v213 = vadd.f32 %v145, %v148
  %vm214 = vcmask 64512
  %215 = vst.msk [vmem:[%s3] sm:$0xff] %vm214, %v150
  %216 = vst.msk [vmem:[%s3 + $0x8] sm:$0xff] %vm214, %v151
  %217 = vst.msk [vmem:[%s3 + $0x10] sm:$0xff] %vm214, %v152
  %218 = vst.msk [vmem:[%s3 + $0x18] sm:$0xff] %vm214, %v153
  %219 = vst.msk [vmem:[%s3 + $0x20] sm:$0xff] %vm214, %v154
  %220 = vst.msk [vmem:[%s3 + $0x28] sm:$0xff] %vm214, %v155
  %221 = vst.msk [vmem:[%s3 + $0x30] sm:$0xff] %vm214, %v156
  %222 = vst.msk [vmem:[%s3 + $0x38] sm:$0xff] %vm214, %v157
  %223 = vst.msk [vmem:[%s3 + $0x40] sm:$0xff] %vm214, %v158
  %224 = vst.msk [vmem:[%s3 + $0x48] sm:$0xff] %vm214, %v159
  %225 = vst.msk [vmem:[%s3 + $0x50] sm:$0xff] %vm214, %v160
  %226 = vst.msk [vmem:[%s3 + $0x58] sm:$0xff] %vm214, %v161
  %227 = vst.msk [vmem:[%s3 + $0x60] sm:$0xff] %vm214, %v162
  %228 = vst.msk [vmem:[%s3 + $0x68] sm:$0xff] %vm214, %v163
  %229 = vst.msk [vmem:[%s3 + $0x70] sm:$0xff] %vm214, %v164
  %230 = vst.msk [vmem:[%s3 + $0x78] sm:$0xff] %vm214, %v165
  %231 = vst.msk [vmem:[%s3 + $0x80] sm:$0xff] %vm214, %v166
  %232 = vst.msk [vmem:[%s3 + $0x88] sm:$0xff] %vm214, %v167
  %233 = vst.msk [vmem:[%s3 + $0x90] sm:$0xff] %vm214, %v168
  %234 = vst.msk [vmem:[%s3 + $0x98] sm:$0xff] %vm214, %v169
  %235 = vst.msk [vmem:[%s3 + $0xa0] sm:$0xff] %vm214, %v170
  %236 = vst.msk [vmem:[%s3 + $0xa8] sm:$0xff] %vm214, %v171
  %237 = vst.msk [vmem:[%s3 + $0xb0] sm:$0xff] %vm214, %v172
  %238 = vst.msk [vmem:[%s3 + $0xb8] sm:$0xff] %vm214, %v173
  %239 = vst.msk [vmem:[%s3 + $0xc0] sm:$0xff] %vm214, %v174
  %240 = vst.msk [vmem:[%s3 + $0xc8] sm:$0xff] %vm214, %v175
  %241 = vst.msk [vmem:[%s3 + $0xd0] sm:$0xff] %vm214, %v176
  %242 = vst.msk [vmem:[%s3 + $0xd8] sm:$0xff] %vm214, %v177
  %243 = vst.msk [vmem:[%s3 + $0xe0] sm:$0xff] %vm214, %v178
  %244 = vst.msk [vmem:[%s3 + $0xe8] sm:$0xff] %vm214, %v179
  %245 = vst.msk [vmem:[%s3 + $0xf0] sm:$0xff] %vm214, %v180
  %246 = vst.msk [vmem:[%s3 + $0xf8] sm:$0xff] %vm214, %v181
  %247 = vst.msk [vmem:[%s3 + $0x100] sm:$0xff] %vm214, %v182
  %248 = vst.msk [vmem:[%s3 + $0x108] sm:$0xff] %vm214, %v183
  %249 = vst.msk [vmem:[%s3 + $0x110] sm:$0xff] %vm214, %v184
  %250 = vst.msk [vmem:[%s3 + $0x118] sm:$0xff] %vm214, %v185
  %251 = vst.msk [vmem:[%s3 + $0x120] sm:$0xff] %vm214, %v186
  %252 = vst.msk [vmem:[%s3 + $0x128] sm:$0xff] %vm214, %v187
  %253 = vst.msk [vmem:[%s3 + $0x130] sm:$0xff] %vm214, %v188
  %254 = vst.msk [vmem:[%s3 + $0x138] sm:$0xff] %vm214, %v189
  %255 = vst.msk [vmem:[%s3 + $0x140] sm:$0xff] %vm214, %v190
  %256 = vst.msk [vmem:[%s3 + $0x148] sm:$0xff] %vm214, %v191
  %257 = vst.msk [vmem:[%s3 + $0x150] sm:$0xff] %vm214, %v192
  %258 = vst.msk [vmem:[%s3 + $0x158] sm:$0xff] %vm214, %v193
  %259 = vst.msk [vmem:[%s3 + $0x160] sm:$0xff] %vm214, %v194
  %260 = vst.msk [vmem:[%s3 + $0x168] sm:$0xff] %vm214, %v195
  %261 = vst.msk [vmem:[%s3 + $0x170] sm:$0xff] %vm214, %v196
  %262 = vst.msk [vmem:[%s3 + $0x178] sm:$0xff] %vm214, %v197
  %263 = vst.msk [vmem:[%s3 + $0x180] sm:$0xff] %vm214, %v198
  %264 = vst.msk [vmem:[%s3 + $0x188] sm:$0xff] %vm214, %v199
  %265 = vst.msk [vmem:[%s3 + $0x190] sm:$0xff] %vm214, %v200
  %266 = vst.msk [vmem:[%s3 + $0x198] sm:$0xff] %vm214, %v201
  %267 = vst.msk [vmem:[%s3 + $0x1a0] sm:$0xff] %vm214, %v202
  %268 = vst.msk [vmem:[%s3 + $0x1a8] sm:$0xff] %vm214, %v203
  %269 = vst.msk [vmem:[%s3 + $0x1b0] sm:$0xff] %vm214, %v204
  %270 = vst.msk [vmem:[%s3 + $0x1b8] sm:$0xff] %vm214, %v205
  %271 = vst.msk [vmem:[%s3 + $0x1c0] sm:$0xff] %vm214, %v206
  %272 = vst.msk [vmem:[%s3 + $0x1c8] sm:$0xff] %vm214, %v207
  %273 = vst.msk [vmem:[%s3 + $0x1d0] sm:$0xff] %vm214, %v208
  %274 = vst.msk [vmem:[%s3 + $0x1d8] sm:$0xff] %vm214, %v209
  %275 = vst.msk [vmem:[%s3 + $0x1e0] sm:$0xff] %vm214, %v210
  %276 = vst.msk [vmem:[%s3 + $0x1e8] sm:$0xff] %vm214, %v211
  %277 = vst.msk [vmem:[%s3 + $0x1f0] sm:$0xff] %vm214, %v212
  %278 = vst.msk [vmem:[%s3 + $0x1f8] sm:$0xff] %vm214, %v213
  // Predicated region
  $region14: #{_lambda_.3} parent=0 // pred_check
    _
  $region15: #{_lambda_.3} parent=0 // pred_check_branch
    %280 = sbr.rel (0) target = $region17
  $region16: #{_lambda_.3} parent=0 // pred_region
    _
  $region17: #{_lambda_.3} parent=0 // pred_fallthru
    _
  // Predicated region
  $region18: #{_lambda_.3} parent=0 // pred_check
    _
  $region19: #{_lambda_.3} parent=0 // pred_check_branch
    %282 = sbr.rel (0) target = $region21
  $region20: #{_lambda_.3} parent=0 // pred_region
    _
  $region21: #{_lambda_.3} parent=0 // pred_fallthru
    _

// kernel: _lambda_.2
$region0: #{_lambda_.2}
  #allocation0 [shape = 'u32[]', space=smem, size = 0x4, offset = 0x4, fixed_abs, tag = 'smem constant byte address 0x4 - core index']
  #allocation1 [shape = 'u32[72,128]{1,0:T(1,128)}', space=vmem, size = 0x9000, scoped, tag = 'internal scratch']
  %s0 = inlined_call_operand.vmem [shape: bf16[2,288,4], index: 0, kind: input, shape index: {}]
  %s1 = inlined_call_operand.vmem [shape: bf16[3,4,8], index: 1, kind: input, shape index: {}]
  %s2 = inlined_call_operand.vmem [shape: f32[2,256,8], index: 2, kind: output, shape index: {0}]
  %s3 = inlined_call_operand.vmem [shape: f32[1,8], index: 3, kind: output, shape index: {1}]
  %s4 = inlined_call_operand.vmem [shape: f32[1,8], index: 4, kind: output, shape index: {2}]
  %5 = xla_tuple %s2, %s3, %s4
  %s6 = sld [smem:[#allocation0]]
  $region61: #{_lambda_.2} parent=0
    _
  %s8 = ssub.s32 1, %s6
  %s9 = scalar_select 0, %s8, %s6
  loop: start=0, step=1, limit=4
  $region2: #{_lambda_.2} parent=0 // loop_pre_header
    _
  $region3: #{_lambda_.2} parent=0 // loop_header
    %s11 = sphi 0, %s15
    %p12 = scmp.ge.s32.totalorder %s11, 4
    %s21 = sphi 0, %s23
    %s24 = sphi 0, %s21
    %s25 = sphi 0, %s24
    %s41 = sphi 0, %s25
    %s45 = sphi 0, %s45
    %s47 = sphi 0, %s45
    %s48 = sphi 0, %s47
    %s62 = sphi 0, %s48
    %s68 = sphi 0, %s70
    %s71 = sphi 0, %s68
    %s72 = sphi 0, %s71
    %s88 = sphi 0, %s72
    %s92 = sphi 0, %s92
    %s94 = sphi 0, %s92
    %s95 = sphi 0, %s94
    %s109 = sphi 0, %s95
    %s113 = sphi 0, %s113
    %s115 = sphi 0, %s113
    %s116 = sphi 0, %s115
    %s130 = sphi 0, %s116
  $region4: #{_lambda_.2} parent=0 // loop_header_branch
    %14 = sbr.rel (%p12) target = $region8
  $region5: #{_lambda_.2} parent=0 // loop_body
    %s16 = ssub.s32 %s11, 1
    %s17 = ssub.s32 %s11, 2
    %s18 = sadd.s32 %s11, 1
    %s19 = ssub.s32 %s11, %s18
    %p20 = scmp.eq.s32.totalorder %s19, 0
    %s22 = sadd.s32 %s21, 1
    %s23 = scalar_select %p20, %s21, %s22
    %p26 = pneg %p20
    %p27 = scmp.eq.s32.totalorder %s11, 1
    %p28 = por %p26, %p27
    %p29 = scmp.ne.s32.totalorder %s21, %s24
    %p30 = scmp.eq.s32.totalorder %s11, 0
    %p31 = por %p29, %p30
    %p32 = scmp.ne.s32.totalorder %s21, %s24
    %p33 = scmp.eq.s32.totalorder %s16, 1
    %p34 = por %p32, %p33
    %p35 = scmp.ne.s32.totalorder %s24, %s25
    %p36 = scmp.eq.s32.totalorder %s16, 0
    %p37 = por %p35, %p36
    %p38 = scmp.ne.s32.totalorder %s24, %s25
    %p39 = scmp.eq.s32.totalorder %s17, 1
    %p40 = por %p38, %p39
    %p42 = scmp.ne.s32.totalorder %s25, %s41
    %p43 = scmp.eq.s32.totalorder %s17, 0
    %p44 = por %p42, %p43
    %s46 = sadd.s32 %s45, 1
    %p49 = scmp.eq.s32.totalorder %s11, 1
    %p50 = scmp.ne.s32.totalorder %s45, %s47
    %p51 = scmp.eq.s32.totalorder %s11, 0
    %p52 = por %p50, %p51
    %p53 = scmp.ne.s32.totalorder %s45, %s47
    %p54 = scmp.eq.s32.totalorder %s16, 1
    %p55 = por %p53, %p54
    %p56 = scmp.ne.s32.totalorder %s47, %s48
    %p57 = scmp.eq.s32.totalorder %s16, 0
    %p58 = por %p56, %p57
    %p59 = scmp.ne.s32.totalorder %s47, %s48
    %p60 = scmp.eq.s32.totalorder %s17, 1
    %p61 = por %p59, %p60
    %p63 = scmp.ne.s32.totalorder %s48, %s62
    %p64 = scmp.eq.s32.totalorder %s17, 0
    %p65 = por %p63, %p64
    %s66 = ssub.s32 %s11, %s18
    %p67 = scmp.eq.s32.totalorder %s66, 0
    %s69 = sadd.s32 %s68, 1
    %s70 = scalar_select %p67, %s68, %s69
    %p73 = pneg %p67
    %p74 = scmp.eq.s32.totalorder %s11, 1
    %p75 = por %p73, %p74
    %p76 = scmp.ne.s32.totalorder %s68, %s71
    %p77 = scmp.eq.s32.totalorder %s11, 0
    %p78 = por %p76, %p77
    %p79 = scmp.ne.s32.totalorder %s68, %s71
    %p80 = scmp.eq.s32.totalorder %s16, 1
    %p81 = por %p79, %p80
    %p82 = scmp.ne.s32.totalorder %s71, %s72
    %p83 = scmp.eq.s32.totalorder %s16, 0
    %p84 = por %p82, %p83
    %p85 = scmp.ne.s32.totalorder %s71, %s72
    %p86 = scmp.eq.s32.totalorder %s17, 1
    %p87 = por %p85, %p86
    %p89 = scmp.ne.s32.totalorder %s72, %s88
    %p90 = scmp.eq.s32.totalorder %s17, 0
    %p91 = por %p89, %p90
    %s93 = sadd.s32 %s92, 1
    %p96 = scmp.eq.s32.totalorder %s11, 1
    %p97 = scmp.ne.s32.totalorder %s92, %s94
    %p98 = scmp.eq.s32.totalorder %s11, 0
    %p99 = por %p97, %p98
    %p100 = scmp.ne.s32.totalorder %s92, %s94
    %p101 = scmp.eq.s32.totalorder %s16, 1
    %p102 = por %p100, %p101
    %p103 = scmp.ne.s32.totalorder %s94, %s95
    %p104 = scmp.eq.s32.totalorder %s16, 0
    %p105 = por %p103, %p104
    %p106 = scmp.ne.s32.totalorder %s94, %s95
    %p107 = scmp.eq.s32.totalorder %s17, 1
    %p108 = por %p106, %p107
    %p110 = scmp.ne.s32.totalorder %s95, %s109
    %p111 = scmp.eq.s32.totalorder %s17, 0
    %p112 = por %p110, %p111
    %s114 = sadd.s32 %s113, 1
    %p117 = scmp.eq.s32.totalorder %s11, 1
    %p118 = scmp.ne.s32.totalorder %s113, %s115
    %p119 = scmp.eq.s32.totalorder %s11, 0
    %p120 = por %p118, %p119
    %p121 = scmp.ne.s32.totalorder %s113, %s115
    %p122 = scmp.eq.s32.totalorder %s16, 1
    %p123 = por %p121, %p122
    %p124 = scmp.ne.s32.totalorder %s115, %s116
    %p125 = scmp.eq.s32.totalorder %s16, 0
    %p126 = por %p124, %p125
    %p127 = scmp.ne.s32.totalorder %s115, %s116
    %p128 = scmp.eq.s32.totalorder %s17, 1
    %p129 = por %p127, %p128
    %p131 = scmp.ne.s32.totalorder %s116, %s130
    %p132 = scmp.eq.s32.totalorder %s17, 0
    %p133 = por %p131, %p132
    %p134 = scmp.le.s32.totalorder 1, %s11
    %p135 = scmp.lt.s32.totalorder %s11, 3
    %p136 = pnand %p134, %p135
    %p137 = pneg %p136
    // Predicated region
    $region9: #{_lambda_.2} parent=5 // pred_check
      _
    $region10: #{_lambda_.2} parent=5 // pred_check_branch
      %139 = sbr.rel (%p136) target = $region12
    $region11: #{_lambda_.2} parent=5 // pred_region
      %s140 = ssub.s32 %s11, 1
      // Predicated region
      $region13: #{_lambda_.2} parent=11 // pred_check
        %p141 = pneg %p58
      $region14: #{_lambda_.2} parent=11 // pred_check_branch
        %143 = sbr.rel (%p141) target = $region16
      $region15: #{_lambda_.2} parent=11 // pred_region
        _
      $region16: #{_lambda_.2} parent=11 // pred_fallthru
        _
    $region12: #{_lambda_.2} parent=5 // pred_fallthru
      _
    %p144 = scmp.lt.s32.totalorder %s11, 2
    // Predicated region
    $region17: #{_lambda_.2} parent=5 // pred_check
      %p145 = pneg %p144
    $region18: #{_lambda_.2} parent=5 // pred_check_branch
      %147 = sbr.rel (%p145) target = $region20
    $region19: #{_lambda_.2} parent=5 // pred_region
      // Predicated region
      $region21: #{_lambda_.2} parent=19 // pred_check
        %p148 = pneg %p31
      $region22: #{_lambda_.2} parent=19 // pred_check_branch
        %150 = sbr.rel (%p148) target = $region24
      $region23: #{_lambda_.2} parent=19 // pred_region
        %p151 = scmp.lt.s32.totalorder %s11, 1
        %s152 = scalar_select %p151, %s11, 1
        %s153 = smul.addr %s152, 36
        %s154 = smul.addr %s153, 4
        %s155 = scalar_lea.vmem %s0, %s154
      $region24: #{_lambda_.2} parent=19 // pred_fallthru
        _
    $region20: #{_lambda_.2} parent=5 // pred_fallthru
      _
    %p156 = scmp.le.s32.totalorder 1, %s11
    %p157 = scmp.lt.s32.totalorder %s11, 3
    %p158 = pnand %p156, %p157
    %p159 = pneg %p158
    // Predicated region
    $region25: #{_lambda_.2} parent=5 // pred_check
      _
    $region26: #{_lambda_.2} parent=5 // pred_check_branch
      %161 = sbr.rel (%p158) target = $region28
    $region27: #{_lambda_.2} parent=5 // pred_region
      %s162 = ssub.s32 %s11, 1
      %p163 = scmp.lt.s32.totalorder %s16, 1
      %s164 = scalar_select %p163, %s16, 1
      %s165 = smul.addr %s164, 36
      %s166 = smul.addr %s165, 4
      %s167 = scalar_lea.vmem %s0, %s166
      %p168 = pneg %p37
      %p169 = pneg %p34
      %p170 = pneg %p58
      %p171 = pneg %p55
      %p172 = pneg %p84
      %p173 = pneg %p81
      %p174 = scmp.lt.s32.totalorder %s16, 1
      %s175 = scalar_select %p174, %s16, 1
      %s176 = smul.addr %s175, 32
      %s177 = smul.addr %s176, 8
      %s178 = scalar_lea.vmem %s2, %s177
      %p179 = pneg %p105
      %p180 = pneg %p102
      %p181 = pneg %p126
      %p182 = pneg %p123
      %p183 = scmp.lt.s32.totalorder %s16, 1
      %s184 = scalar_select %p183, %s16, 1
      %s185 = smul.addr %s184, 36
      %s186 = smul.addr %s185, 4
      %s187 = scalar_lea.vmem %s0, %s186
      %p188 = scmp.lt.s32.totalorder %s16, 1
      %s189 = scalar_select %p188, %s16, 1
      %s190 = smul.addr %s189, 32
      %s191 = smul.addr %s190, 8
      %s192 = scalar_lea.vmem %s2, %s191
      %v194 = vld [vmem:[%s187] sm:$0xf]
      %v195 = vld [vmem:[%s187 + $0x4] sm:$0xf]
      %v196 = vld [vmem:[%s187 + $0x8] sm:$0xf]
      %v197 = vld [vmem:[%s187 + $0xc] sm:$0xf]
      %v198 = vld [vmem:[%s187 + $0x10] sm:$0xf]
      %v199 = vld [vmem:[%s187 + $0x14] sm:$0xf]
      %v200 = vld [vmem:[%s187 + $0x18] sm:$0xf]
      %v201 = vld [vmem:[%s187 + $0x1c] sm:$0xf]
      %v202 = vld [vmem:[%s187 + $0x20] sm:$0xf]
      %v203 = vld [vmem:[%s187 + $0x24] sm:$0xf]
      %v204 = vld [vmem:[%s187 + $0x28] sm:$0xf]
      %v205 = vld [vmem:[%s187 + $0x2c] sm:$0xf]
      %v206 = vld [vmem:[%s187 + $0x30] sm:$0xf]
      %v207 = vld [vmem:[%s187 + $0x34] sm:$0xf]
      %v208 = vld [vmem:[%s187 + $0x38] sm:$0xf]
      %v209 = vld [vmem:[%s187 + $0x3c] sm:$0xf]
      %v210 = vld [vmem:[%s187 + $0x40] sm:$0xf]
      %v211 = vld [vmem:[%s187 + $0x44] sm:$0xf]
      %v212 = vld [vmem:[%s187 + $0x48] sm:$0xf]
      %v213 = vld [vmem:[%s187 + $0x4c] sm:$0xf]
      %v214 = vld [vmem:[%s187 + $0x50] sm:$0xf]
      %v215 = vld [vmem:[%s187 + $0x54] sm:$0xf]
      %v216 = vld [vmem:[%s187 + $0x58] sm:$0xf]
      %v217 = vld [vmem:[%s187 + $0x5c] sm:$0xf]
      %v218 = vld [vmem:[%s187 + $0x60] sm:$0xf]
      %v219 = vld [vmem:[%s187 + $0x64] sm:$0xf]
      %v220 = vld [vmem:[%s187 + $0x68] sm:$0xf]
      %v221 = vld [vmem:[%s187 + $0x6c] sm:$0xf]
      %v222 = vld [vmem:[%s187 + $0x70] sm:$0xf]
      %v223 = vld [vmem:[%s187 + $0x74] sm:$0xf]
      %v224 = vld [vmem:[%s187 + $0x78] sm:$0xf]
      %v225 = vld [vmem:[%s187 + $0x7c] sm:$0xf]
      %v226 = vld [vmem:[%s1] sm:$0x3]
      %v227 = vld [vmem:[%s187 + $0x80] sm:$0xf]
      %v228 = vld [vmem:[%s187 + $0x84] sm:$0xf]
      %s229 = scalar_lea.vmem %s1, 2
      %v230 = vld [vmem:[%s229] sm:$0x3]
      %v263 = vunpack.c.l.b16 %v196
      %v264 = vunpack.c.l.b16 %v197
      %v265 = vunpack.c.l.b16 %v198
      %v266 = vunpack.c.l.b16 %v199
      %v267 = vunpack.c.l.b16 %v200
      %v268 = vunpack.c.l.b16 %v201
      %v269 = vunpack.c.l.b16 %v202
      %v270 = vunpack.c.l.b16 %v203
      %v271 = vunpack.c.l.b16 %v204
      %v272 = vunpack.c.l.b16 %v205
      %v273 = vunpack.c.l.b16 %v206
      %v274 = vunpack.c.l.b16 %v207
      %v275 = vunpack.c.l.b16 %v208
      %v276 = vunpack.c.l.b16 %v209
      %v277 = vunpack.c.l.b16 %v210
      %v278 = vunpack.c.l.b16 %v211
      %v279 = vunpack.c.l.b16 %v212
      %v280 = vunpack.c.l.b16 %v213
      %v281 = vunpack.c.l.b16 %v214
      %v282 = vunpack.c.l.b16 %v215
      %v283 = vunpack.c.l.b16 %v216
      %v284 = vunpack.c.l.b16 %v217
      %v285 = vunpack.c.l.b16 %v218
      %v286 = vunpack.c.l.b16 %v219
      %v287 = vunpack.c.l.b16 %v220
      %v288 = vunpack.c.l.b16 %v221
      %v289 = vunpack.c.l.b16 %v222
      %v290 = vunpack.c.l.b16 %v223
      %v291 = vunpack.c.l.b16 %v224
      %v292 = vunpack.c.l.b16 %v225
      %v293 = vunpack.c.l.b16 %v227
      %v294 = vunpack.c.l.b16 %v228
      %v295 = vpack.c.b16 %v264, %v263
      %v296 = vpack.c.b16 %v266, %v265
      %v297 = vpack.c.b16 %v268, %v267
      %v298 = vpack.c.b16 %v270, %v269
      %v299 = vpack.c.b16 %v272, %v271
      %v300 = vpack.c.b16 %v274, %v273
      %v301 = vpack.c.b16 %v276, %v275
      %v302 = vpack.c.b16 %v278, %v277
      %v303 = vpack.c.b16 %v280, %v279
      %v304 = vpack.c.b16 %v282, %v281
      %v305 = vpack.c.b16 %v284, %v283
      %v306 = vpack.c.b16 %v286, %v285
      %v307 = vpack.c.b16 %v288, %v287
      %v308 = vpack.c.b16 %v290, %v289
      %v309 = vpack.c.b16 %v292, %v291
      %v310 = vpack.c.b16 %v294, %v293
      %vm311 = vcmask 31744
      %v313 = vsel %vm311, %v295, 0
      %v316 = vsel %vm311, %v296, 0
      %v319 = vsel %vm311, %v297, 0
      %v322 = vsel %vm311, %v298, 0
      %v325 = vsel %vm311, %v299, 0
      %v328 = vsel %vm311, %v300, 0
      %v331 = vsel %vm311, %v301, 0
      %v334 = vsel %vm311, %v302, 0
      %v337 = vsel %vm311, %v303, 0
      %v340 = vsel %vm311, %v304, 0
      %v343 = vsel %vm311, %v305, 0
      %v346 = vsel %vm311, %v306, 0
      %v349 = vsel %vm311, %v307, 0
      %v352 = vsel %vm311, %v308, 0
      %v355 = vsel %vm311, %v309, 0
      %v358 = vsel %vm311, %v310, 0
      %vm360 = vcmask 1041408
      %v362 = vsel %vm360, %v230, 0
      %364 = vmatpush.bf16.msra.mxu0 0
      %365 = vmatpush.bf16.msra.mxu0 0
      %366 = vmatpush.bf16.msra.mxu0 0
      %367 = vmatpush.bf16.msra.mxu0 0
      %368 = vmatpush.bf16.msra.mxu0 0
      %369 = vmatpush.bf16.msra.mxu0 0
      %370 = vmatpush.bf16.msra.mxu0 0
      %371 = vmatpush.bf16.msra.mxu0 %v362
      %372 = vmatmul.bf16.gmra.mxu0 %v313
      %v373 = vpop.f32.mrf.mxu0
      %v374 = vadd.f32 0.0, %v373
      %v375 = vpop.f32.mrf.mxu0
      %v376 = vadd.f32 0.0, %v375
      %377 = vmatmul.bf16.gmra.mxu0 %v316
      %v378 = vpop.f32.mrf.mxu0
      %v379 = vadd.f32 0.0, %v378
      %v380 = vpop.f32.mrf.mxu0
      %v381 = vadd.f32 0.0, %v380
      %382 = vmatmul.bf16.gmra.mxu0 %v319
      %v383 = vpop.f32.mrf.mxu0
      %v384 = vadd.f32 0.0, %v383
      %v385 = vpop.f32.mrf.mxu0
      %v386 = vadd.f32 0.0, %v385
      %387 = vmatmul.bf16.gmra.mxu0 %v322
      %v388 = vpop.f32.mrf.mxu0
      %v389 = vadd.f32 0.0, %v388
      %v390 = vpop.f32.mrf.mxu0
      %v391 = vadd.f32 0.0, %v390
      %392 = vmatmul.bf16.gmra.mxu0 %v325
      %v393 = vpop.f32.mrf.mxu0
      %v394 = vadd.f32 0.0, %v393
      %v395 = vpop.f32.mrf.mxu0
      %v396 = vadd.f32 0.0, %v395
      %397 = vmatmul.bf16.gmra.mxu0 %v328
      %v398 = vpop.f32.mrf.mxu0
      %v399 = vadd.f32 0.0, %v398
      %v400 = vpop.f32.mrf.mxu0
      %v401 = vadd.f32 0.0, %v400
      %402 = vmatmul.bf16.gmra.mxu0 %v331
      %v403 = vpop.f32.mrf.mxu0
      %v404 = vadd.f32 0.0, %v403
      %v405 = vpop.f32.mrf.mxu0
      %v406 = vadd.f32 0.0, %v405
      %407 = vmatmul.bf16.gmra.mxu0 %v334
      %v408 = vpop.f32.mrf.mxu0
      %v409 = vadd.f32 0.0, %v408
      %v410 = vpop.f32.mrf.mxu0
      %v411 = vadd.f32 0.0, %v410
      %412 = vmatmul.bf16.gmra.mxu0 %v337
      %v413 = vpop.f32.mrf.mxu0
      %v414 = vadd.f32 0.0, %v413
      %v415 = vpop.f32.mrf.mxu0
      %v416 = vadd.f32 0.0, %v415
      %417 = vmatmul.bf16.gmra.mxu0 %v340
      %v418 = vpop.f32.mrf.mxu0
      %v419 = vadd.f32 0.0, %v418
      %v420 = vpop.f32.mrf.mxu0
      %v421 = vadd.f32 0.0, %v420
      %422 = vmatmul.bf16.gmra.mxu0 %v343
      %v423 = vpop.f32.mrf.mxu0
      %v424 = vadd.f32 0.0, %v423
      %v425 = vpop.f32.mrf.mxu0
      %v426 = vadd.f32 0.0, %v425
      %427 = vmatmul.bf16.gmra.mxu0 %v346
      %v428 = vpop.f32.mrf.mxu0
      %v429 = vadd.f32 0.0, %v428
      %v430 = vpop.f32.mrf.mxu0
      %v431 = vadd.f32 0.0, %v430
      %432 = vmatmul.bf16.gmra.mxu0 %v349
      %v433 = vpop.f32.mrf.mxu0
      %v434 = vadd.f32 0.0, %v433
      %v435 = vpop.f32.mrf.mxu0
      %v436 = vadd.f32 0.0, %v435
      %437 = vmatmul.bf16.gmra.mxu0 %v352
      %v438 = vpop.f32.mrf.mxu0
      %v439 = vadd.f32 0.0, %v438
      %v440 = vpop.f32.mrf.mxu0
      %v441 = vadd.f32 0.0, %v440
      %442 = vmatmul.bf16.gmra.mxu0 %v355
      %v443 = vpop.f32.mrf.mxu0
      %v444 = vadd.f32 0.0, %v443
      %v445 = vpop.f32.mrf.mxu0
      %v446 = vadd.f32 0.0, %v445
      %447 = vmatmul.bf16.gmra.mxu0 %v358
      %v448 = vpop.f32.mrf.mxu0
      %v449 = vadd.f32 0.0, %v448
      %v450 = vpop.f32.mrf.mxu0
      %v451 = vadd.f32 0.0, %v450
      %452 = vdwg.mxu0
      %v455 = vunpack.c.l.b16 %v194
      %v456 = vunpack.c.l.b16 %v195
      %v457 = vpack.c.b16 %v456, %v455
      %v459 = vsel %vm311, %v457, 0
      %v462 = vsel %vm360, %v226, 0
      %464 = vmatpush.bf16.msra.mxu0 0
      %465 = vmatpush.bf16.msra.mxu0 0
      %466 = vmatpush.bf16.msra.mxu0 0
      %467 = vmatpush.bf16.msra.mxu0 0
      %468 = vmatpush.bf16.msra.mxu0 0
      %469 = vmatpush.bf16.msra.mxu0 0
      %470 = vmatpush.bf16.msra.mxu0 0
      %471 = vmatpush.bf16.msra.mxu0 %v462
      %472 = vmatmul.bf16.gmra.mxu0 %v459
      %v473 = vpop.f32.mrf.mxu0
      %v474 = vadd.f32 %v374, %v473
      %v475 = vpop.f32.mrf.mxu0
      %v476 = vadd.f32 %v376, %v475
      %477 = vmatmul.bf16.gmra.mxu0 %v313
      %v478 = vpop.f32.mrf.mxu0
      %v479 = vadd.f32 %v379, %v478
      %v480 = vpop.f32.mrf.mxu0
      %v481 = vadd.f32 %v381, %v480
      %482 = vmatmul.bf16.gmra.mxu0 %v316
      %v483 = vpop.f32.mrf.mxu0
      %v484 = vadd.f32 %v384, %v483
      %v485 = vpop.f32.mrf.mxu0
      %v486 = vadd.f32 %v386, %v485
      %487 = vmatmul.bf16.gmra.mxu0 %v319
      %v488 = vpop.f32.mrf.mxu0
      %v489 = vadd.f32 %v389, %v488
      %v490 = vpop.f32.mrf.mxu0
      %v491 = vadd.f32 %v391, %v490
      %492 = vmatmul.bf16.gmra.mxu0 %v322
      %v493 = vpop.f32.mrf.mxu0
      %v494 = vadd.f32 %v394, %v493
      %v495 = vpop.f32.mrf.mxu0
      %v496 = vadd.f32 %v396, %v495
      %497 = vmatmul.bf16.gmra.mxu0 %v325
      %v498 = vpop.f32.mrf.mxu0
      %v499 = vadd.f32 %v399, %v498
      %v500 = vpop.f32.mrf.mxu0
      %v501 = vadd.f32 %v401, %v500
      %502 = vmatmul.bf16.gmra.mxu0 %v328
      %v503 = vpop.f32.mrf.mxu0
      %v504 = vadd.f32 %v404, %v503
      %v505 = vpop.f32.mrf.mxu0
      %v506 = vadd.f32 %v406, %v505
      %507 = vmatmul.bf16.gmra.mxu0 %v331
      %v508 = vpop.f32.mrf.mxu0
      %v509 = vadd.f32 %v409, %v508
      %v510 = vpop.f32.mrf.mxu0
      %v511 = vadd.f32 %v411, %v510
      %512 = vmatmul.bf16.gmra.mxu0 %v334
      %v513 = vpop.f32.mrf.mxu0
      %v514 = vadd.f32 %v414, %v513
      %v515 = vpop.f32.mrf.mxu0
      %v516 = vadd.f32 %v416, %v515
      %517 = vmatmul.bf16.gmra.mxu0 %v337
      %v518 = vpop.f32.mrf.mxu0
      %v519 = vadd.f32 %v419, %v518
      %v520 = vpop.f32.mrf.mxu0
      %v521 = vadd.f32 %v421, %v520
      %522 = vmatmul.bf16.gmra.mxu0 %v340
      %v523 = vpop.f32.mrf.mxu0
      %v524 = vadd.f32 %v424, %v523
      %v525 = vpop.f32.mrf.mxu0
      %v526 = vadd.f32 %v426, %v525
      %527 = vmatmul.bf16.gmra.mxu0 %v343
      %v528 = vpop.f32.mrf.mxu0
      %v529 = vadd.f32 %v429, %v528
      %v530 = vpop.f32.mrf.mxu0
      %v531 = vadd.f32 %v431, %v530
      %532 = vmatmul.bf16.gmra.mxu0 %v346
      %v533 = vpop.f32.mrf.mxu0
      %v534 = vadd.f32 %v434, %v533
      %v535 = vpop.f32.mrf.mxu0
      %v536 = vadd.f32 %v436, %v535
      %537 = vmatmul.bf16.gmra.mxu0 %v349
      %v538 = vpop.f32.mrf.mxu0
      %v539 = vadd.f32 %v439, %v538
      %v540 = vpop.f32.mrf.mxu0
      %v541 = vadd.f32 %v441, %v540
      %542 = vmatmul.bf16.gmra.mxu0 %v352
      %v543 = vpop.f32.mrf.mxu0
      %v544 = vadd.f32 %v444, %v543
      %v545 = vpop.f32.mrf.mxu0
      %v546 = vadd.f32 %v446, %v545
      %547 = vmatmul.bf16.gmra.mxu0 %v355
      %v548 = vpop.f32.mrf.mxu0
      %v549 = vadd.f32 %v449, %v548
      %v550 = vpop.f32.mrf.mxu0
      %v551 = vadd.f32 %v451, %v550
      %552 = vdwg.mxu0
      %v553 = vld [vmem:[%s187 + $0x10] sm:$0xf]
      %v554 = vld [vmem:[%s187 + $0x14] sm:$0xf]
      %v555 = vld [vmem:[%s187 + $0x18] sm:$0xf]
      %v556 = vld [vmem:[%s187 + $0x1c] sm:$0xf]
      %v557 = vld [vmem:[%s187 + $0x20] sm:$0xf]
      %v558 = vld [vmem:[%s187 + $0x24] sm:$0xf]
      %v559 = vld [vmem:[%s187 + $0x28] sm:$0xf]
      %v560 = vld [vmem:[%s187 + $0x2c] sm:$0xf]
      %v561 = vld [vmem:[%s187 + $0x30] sm:$0xf]
      %v562 = vld [vmem:[%s187 + $0x34] sm:$0xf]
      %v563 = vld [vmem:[%s187 + $0x38] sm:$0xf]
      %v564 = vld [vmem:[%s187 + $0x3c] sm:$0xf]
      %v565 = vld [vmem:[%s187 + $0x40] sm:$0xf]
      %v566 = vld [vmem:[%s187 + $0x44] sm:$0xf]
      %v567 = vld [vmem:[%s187 + $0x48] sm:$0xf]
      %v568 = vld [vmem:[%s187 + $0x4c] sm:$0xf]
      %v569 = vld [vmem:[%s187 + $0x50] sm:$0xf]
      %v570 = vld [vmem:[%s187 + $0x54] sm:$0xf]
      %v571 = vld [vmem:[%s187 + $0x58] sm:$0xf]
      %v572 = vld [vmem:[%s187 + $0x5c] sm:$0xf]
      %v573 = vld [vmem:[%s187 + $0x60] sm:$0xf]
      %v574 = vld [vmem:[%s187 + $0x64] sm:$0xf]
      %v575 = vld [vmem:[%s187 + $0x68] sm:$0xf]
      %v576 = vld [vmem:[%s187 + $0x6c] sm:$0xf]
      %v577 = vld [vmem:[%s187 + $0x70] sm:$0xf]
      %v578 = vld [vmem:[%s187 + $0x74] sm:$0xf]
      %v579 = vld [vmem:[%s187 + $0x78] sm:$0xf]
      %v580 = vld [vmem:[%s187 + $0x7c] sm:$0xf]
      %v581 = vld [vmem:[%s187 + $0x80] sm:$0xf]
      %v582 = vld [vmem:[%s187 + $0x84] sm:$0xf]
      %v583 = vld [vmem:[%s187 + $0x88] sm:$0xf]
      %v584 = vld [vmem:[%s187 + $0x8c] sm:$0xf]
      %s585 = scalar_lea.vmem %s1, 4
      %v586 = vld [vmem:[%s585] sm:$0x3]
      %v619 = vunpack.c.l.b16 %v553
      %v620 = vunpack.c.l.b16 %v554
      %v621 = vunpack.c.l.b16 %v555
      %v622 = vunpack.c.l.b16 %v556
      %v623 = vunpack.c.l.b16 %v557
      %v624 = vunpack.c.l.b16 %v558
      %v625 = vunpack.c.l.b16 %v559
      %v626 = vunpack.c.l.b16 %v560
      %v627 = vunpack.c.l.b16 %v561
      %v628 = vunpack.c.l.b16 %v562
      %v629 = vunpack.c.l.b16 %v563
      %v630 = vunpack.c.l.b16 %v564
      %v631 = vunpack.c.l.b16 %v565
      %v632 = vunpack.c.l.b16 %v566
      %v633 = vunpack.c.l.b16 %v567
      %v634 = vunpack.c.l.b16 %v568
      %v635 = vunpack.c.l.b16 %v569
      %v636 = vunpack.c.l.b16 %v570
      %v637 = vunpack.c.l.b16 %v571
      %v638 = vunpack.c.l.b16 %v572
      %v639 = vunpack.c.l.b16 %v573
      %v640 = vunpack.c.l.b16 %v574
      %v641 = vunpack.c.l.b16 %v575
      %v642 = vunpack.c.l.b16 %v576
      %v643 = vunpack.c.l.b16 %v577
      %v644 = vunpack.c.l.b16 %v578
      %v645 = vunpack.c.l.b16 %v579
      %v646 = vunpack.c.l.b16 %v580
      %v647 = vunpack.c.l.b16 %v581
      %v648 = vunpack.c.l.b16 %v582
      %v649 = vunpack.c.l.b16 %v583
      %v650 = vunpack.c.l.b16 %v584
      %v651 = vpack.c.b16 %v620, %v619
      %v652 = vpack.c.b16 %v622, %v621
      %v653 = vpack.c.b16 %v624, %v623
      %v654 = vpack.c.b16 %v626, %v625
      %v655 = vpack.c.b16 %v628, %v627
      %v656 = vpack.c.b16 %v630, %v629
      %v657 = vpack.c.b16 %v632, %v631
      %v658 = vpack.c.b16 %v634, %v633
      %v659 = vpack.c.b16 %v636, %v635
      %v660 = vpack.c.b16 %v638, %v637
      %v661 = vpack.c.b16 %v640, %v639
      %v662 = vpack.c.b16 %v642, %v641
      %v663 = vpack.c.b16 %v644, %v643
      %v664 = vpack.c.b16 %v646, %v645
      %v665 = vpack.c.b16 %v648, %v647
      %v666 = vpack.c.b16 %v650, %v649
      %v668 = vsel %vm311, %v651, 0
      %v671 = vsel %vm311, %v652, 0
      %v674 = vsel %vm311, %v653, 0
      %v677 = vsel %vm311, %v654, 0
      %v680 = vsel %vm311, %v655, 0
      %v683 = vsel %vm311, %v656, 0
      %v686 = vsel %vm311, %v657, 0
      %v689 = vsel %vm311, %v658, 0
      %v692 = vsel %vm311, %v659, 0
      %v695 = vsel %vm311, %v660, 0
      %v698 = vsel %vm311, %v661, 0
      %v701 = vsel %vm311, %v662, 0
      %v704 = vsel %vm311, %v663, 0
      %v707 = vsel %vm311, %v664, 0
      %v710 = vsel %vm311, %v665, 0
      %v713 = vsel %vm311, %v666, 0
      %v716 = vsel %vm360, %v586, 0
      %718 = vmatpush.bf16.msra.mxu0 0
      %719 = vmatpush.bf16.msra.mxu0 0
      %720 = vmatpush.bf16.msra.mxu0 0
      %721 = vmatpush.bf16.msra.mxu0 0
      %722 = vmatpush.bf16.msra.mxu0 0
      %723 = vmatpush.bf16.msra.mxu0 0
      %724 = vmatpush.bf16.msra.mxu0 0
      %725 = vmatpush.bf16.msra.mxu0 %v716
      %726 = vmatmul.bf16.gmra.mxu0 %v668
      %v727 = vpop.f32.mrf.mxu0
      %v728 = vadd.f32 0.0, %v727
      %v729 = vpop.f32.mrf.mxu0
      %v730 = vadd.f32 0.0, %v729
      %731 = vmatmul.bf16.gmra.mxu0 %v671
      %v732 = vpop.f32.mrf.mxu0
      %v733 = vadd.f32 0.0, %v732
      %v734 = vpop.f32.mrf.mxu0
      %v735 = vadd.f32 0.0, %v734
      %736 = vmatmul.bf16.gmra.mxu0 %v674
      %v737 = vpop.f32.mrf.mxu0
      %v738 = vadd.f32 0.0, %v737
      %v739 = vpop.f32.mrf.mxu0
      %v740 = vadd.f32 0.0, %v739
      %741 = vmatmul.bf16.gmra.mxu0 %v677
      %v742 = vpop.f32.mrf.mxu0
      %v743 = vadd.f32 0.0, %v742
      %v744 = vpop.f32.mrf.mxu0
      %v745 = vadd.f32 0.0, %v744
      %746 = vmatmul.bf16.gmra.mxu0 %v680
      %v747 = vpop.f32.mrf.mxu0
      %v748 = vadd.f32 0.0, %v747
      %v749 = vpop.f32.mrf.mxu0
      %v750 = vadd.f32 0.0, %v749
      %751 = vmatmul.bf16.gmra.mxu0 %v683
      %v752 = vpop.f32.mrf.mxu0
      %v753 = vadd.f32 0.0, %v752
      %v754 = vpop.f32.mrf.mxu0
      %v755 = vadd.f32 0.0, %v754
      %756 = vmatmul.bf16.gmra.mxu0 %v686
      %v757 = vpop.f32.mrf.mxu0
      %v758 = vadd.f32 0.0, %v757
      %v759 = vpop.f32.mrf.mxu0
      %v760 = vadd.f32 0.0, %v759
      %761 = vmatmul.bf16.gmra.mxu0 %v689
      %v762 = vpop.f32.mrf.mxu0
      %v763 = vadd.f32 0.0, %v762
      %v764 = vpop.f32.mrf.mxu0
      %v765 = vadd.f32 0.0, %v764
      %766 = vmatmul.bf16.gmra.mxu0 %v692
      %v767 = vpop.f32.mrf.mxu0
      %v768 = vadd.f32 0.0, %v767
      %v769 = vpop.f32.mrf.mxu0
      %v770 = vadd.f32 0.0, %v769
      %771 = vmatmul.bf16.gmra.mxu0 %v695
      %v772 = vpop.f32.mrf.mxu0
      %v773 = vadd.f32 0.0, %v772
      %v774 = vpop.f32.mrf.mxu0
      %v775 = vadd.f32 0.0, %v774
      %776 = vmatmul.bf16.gmra.mxu0 %v698
      %v777 = vpop.f32.mrf.mxu0
      %v778 = vadd.f32 0.0, %v777
      %v779 = vpop.f32.mrf.mxu0
      %v780 = vadd.f32 0.0, %v779
      %781 = vmatmul.bf16.gmra.mxu0 %v701
      %v782 = vpop.f32.mrf.mxu0
      %v783 = vadd.f32 0.0, %v782
      %v784 = vpop.f32.mrf.mxu0
      %v785 = vadd.f32 0.0, %v784
      %786 = vmatmul.bf16.gmra.mxu0 %v704
      %v787 = vpop.f32.mrf.mxu0
      %v788 = vadd.f32 0.0, %v787
      %v789 = vpop.f32.mrf.mxu0
      %v790 = vadd.f32 0.0, %v789
      %791 = vmatmul.bf16.gmra.mxu0 %v707
      %v792 = vpop.f32.mrf.mxu0
      %v793 = vadd.f32 0.0, %v792
      %v794 = vpop.f32.mrf.mxu0
      %v795 = vadd.f32 0.0, %v794
      %796 = vmatmul.bf16.gmra.mxu0 %v710
      %v797 = vpop.f32.mrf.mxu0
      %v798 = vadd.f32 0.0, %v797
      %v799 = vpop.f32.mrf.mxu0
      %v800 = vadd.f32 0.0, %v799
      %801 = vmatmul.bf16.gmra.mxu0 %v713
      %v802 = vpop.f32.mrf.mxu0
      %v803 = vadd.f32 0.0, %v802
      %v804 = vpop.f32.mrf.mxu0
      %v805 = vadd.f32 0.0, %v804
      %806 = vdwg.mxu0
      %v807 = vadd.f32 %v474, %v728
      %v808 = vadd.f32 %v476, %v730
      %v809 = vadd.f32 %v479, %v733
      %v810 = vadd.f32 %v481, %v735
      %v811 = vadd.f32 %v484, %v738
      %v812 = vadd.f32 %v486, %v740
      %v813 = vadd.f32 %v489, %v743
      %v814 = vadd.f32 %v491, %v745
      %v815 = vadd.f32 %v494, %v748
      %v816 = vadd.f32 %v496, %v750
      %v817 = vadd.f32 %v499, %v753
      %v818 = vadd.f32 %v501, %v755
      %v819 = vadd.f32 %v504, %v758
      %v820 = vadd.f32 %v506, %v760
      %v821 = vadd.f32 %v509, %v763
      %v822 = vadd.f32 %v511, %v765
      %v823 = vadd.f32 %v514, %v768
      %v824 = vadd.f32 %v516, %v770
      %v825 = vadd.f32 %v519, %v773
      %v826 = vadd.f32 %v521, %v775
      %v827 = vadd.f32 %v524, %v778
      %v828 = vadd.f32 %v526, %v780
      %v829 = vadd.f32 %v529, %v783
      %v830 = vadd.f32 %v531, %v785
      %v831 = vadd.f32 %v534, %v788
      %v832 = vadd.f32 %v536, %v790
      %v833 = vadd.f32 %v539, %v793
      %v834 = vadd.f32 %v541, %v795
      %v835 = vadd.f32 %v544, %v798
      %v836 = vadd.f32 %v546, %v800
      %v837 = vadd.f32 %v549, %v803
      %v838 = vadd.f32 %v551, %v805
      %vm839 = vcmask 64512
      %840 = vst.msk [vmem:[%s192] sm:$0xff] %vm839, %v807
      %841 = vst.msk [vmem:[%s192 + $0x8] sm:$0xff] %vm839, %v808
      %842 = vst.msk [vmem:[%s192 + $0x10] sm:$0xff] %vm839, %v809
      %843 = vst.msk [vmem:[%s192 + $0x18] sm:$0xff] %vm839, %v810
      %844 = vst.msk [vmem:[%s192 + $0x20] sm:$0xff] %vm839, %v811
      %845 = vst.msk [vmem:[%s192 + $0x28] sm:$0xff] %vm839, %v812
      %846 = vst.msk [vmem:[%s192 + $0x30] sm:$0xff] %vm839, %v813
      %847 = vst.msk [vmem:[%s192 + $0x38] sm:$0xff] %vm839, %v814
      %848 = vst.msk [vmem:[%s192 + $0x40] sm:$0xff] %vm839, %v815
      %849 = vst.msk [vmem:[%s192 + $0x48] sm:$0xff] %vm839, %v816
      %850 = vst.msk [vmem:[%s192 + $0x50] sm:$0xff] %vm839, %v817
      %851 = vst.msk [vmem:[%s192 + $0x58] sm:$0xff] %vm839, %v818
      %852 = vst.msk [vmem:[%s192 + $0x60] sm:$0xff] %vm839, %v819
      %853 = vst.msk [vmem:[%s192 + $0x68] sm:$0xff] %vm839, %v820
      %854 = vst.msk [vmem:[%s192 + $0x70] sm:$0xff] %vm839, %v821
      %855 = vst.msk [vmem:[%s192 + $0x78] sm:$0xff] %vm839, %v822
      %856 = vst.msk [vmem:[%s192 + $0x80] sm:$0xff] %vm839, %v823
      %857 = vst.msk [vmem:[%s192 + $0x88] sm:$0xff] %vm839, %v824
      %858 = vst.msk [vmem:[%s192 + $0x90] sm:$0xff] %vm839, %v825
      %859 = vst.msk [vmem:[%s192 + $0x98] sm:$0xff] %vm839, %v826
      %860 = vst.msk [vmem:[%s192 + $0xa0] sm:$0xff] %vm839, %v827
      %861 = vst.msk [vmem:[%s192 + $0xa8] sm:$0xff] %vm839, %v828
      %862 = vst.msk [vmem:[%s192 + $0xb0] sm:$0xff] %vm839, %v829
      %863 = vst.msk [vmem:[%s192 + $0xb8] sm:$0xff] %vm839, %v830
      %864 = vst.msk [vmem:[%s192 + $0xc0] sm:$0xff] %vm839, %v831
      %865 = vst.msk [vmem:[%s192 + $0xc8] sm:$0xff] %vm839, %v832
      %866 = vst.msk [vmem:[%s192 + $0xd0] sm:$0xff] %vm839, %v833
      %867 = vst.msk [vmem:[%s192 + $0xd8] sm:$0xff] %vm839, %v834
      %868 = vst.msk [vmem:[%s192 + $0xe0] sm:$0xff] %vm839, %v835
      %869 = vst.msk [vmem:[%s192 + $0xe8] sm:$0xff] %vm839, %v836
      %870 = vst.msk [vmem:[%s192 + $0xf0] sm:$0xff] %vm839, %v837
      %871 = vst.msk [vmem:[%s192 + $0xf8] sm:$0xff] %vm839, %v838
      %p872 = scmp.eq.s32.totalorder %s16, 0
      // Predicated region
      $region29: #{_lambda_.2} parent=27 // pred_check
        %p873 = pneg %p872
      $region30: #{_lambda_.2} parent=27 // pred_check_branch
        %875 = sbr.rel (%p873) target = $region32
      $region31: #{_lambda_.2} parent=27 // pred_region
        %vm876 = vcmask 57344
        %877 = vst.msk [vmem:[%s3] sm:$0x1] %vm876, 0.0
        %878 = vst.msk [vmem:[%s4] sm:$0x1] %vm876, 0.0
      $region32: #{_lambda_.2} parent=27 // pred_fallthru
        _
      %v879 = vld [vmem:[%s3] sm:$0x1]
      %v880 = vsel %vm839, %v807, 0.0
      %v881 = vsel %vm839, %v808, 0.0
      %v882 = vadd.f32 %v880, %v881
      %v883 = vsel %vm839, %v809, 0.0
      %v884 = vadd.f32 %v882, %v883
      %v885 = vsel %vm839, %v810, 0.0
      %v886 = vadd.f32 %v884, %v885
      %v887 = vsel %vm839, %v811, 0.0
      %v888 = vadd.f32 %v886, %v887
      %v889 = vsel %vm839, %v812, 0.0
      %v890 = vadd.f32 %v888, %v889
      %v891 = vsel %vm839, %v813, 0.0
      %v892 = vadd.f32 %v890, %v891
      %v893 = vsel %vm839, %v814, 0.0
      %v894 = vadd.f32 %v892, %v893
      %v895 = vsel %vm839, %v815, 0.0
      %v896 = vadd.f32 %v894, %v895
      %v897 = vsel %vm839, %v816, 0.0
      %v898 = vadd.f32 %v896, %v897
      %v899 = vsel %vm839, %v817, 0.0
      %v900 = vadd.f32 %v898, %v899
      %v901 = vsel %vm839, %v818, 0.0
      %v902 = vadd.f32 %v900, %v901
      %v903 = vsel %vm839, %v819, 0.0
      %v904 = vadd.f32 %v902, %v903
      %v905 = vsel %vm839, %v820, 0.0
      %v906 = vadd.f32 %v904, %v905
      %v907 = vsel %vm839, %v821, 0.0
      %v908 = vadd.f32 %v906, %v907
      %v909 = vsel %vm839, %v822, 0.0
      %v910 = vadd.f32 %v908, %v909
      %v911 = vsel %vm839, %v823, 0.0
      %v912 = vadd.f32 %v910, %v911
      %v913 = vsel %vm839, %v824, 0.0
      %v914 = vadd.f32 %v912, %v913
      %v915 = vsel %vm839, %v825, 0.0
      %v916 = vadd.f32 %v914, %v915
      %v917 = vsel %vm839, %v826, 0.0
      %v918 = vadd.f32 %v916, %v917
      %v919 = vsel %vm839, %v827, 0.0
      %v920 = vadd.f32 %v918, %v919
      %v921 = vsel %vm839, %v828, 0.0
      %v922 = vadd.f32 %v920, %v921
      %v923 = vsel %vm839, %v829, 0.0
      %v924 = vadd.f32 %v922, %v923
      %v925 = vsel %vm839, %v830, 0.0
      %v926 = vadd.f32 %v924, %v925
      %v927 = vsel %vm839, %v831, 0.0
      %v928 = vadd.f32 %v926, %v927
      %v929 = vsel %vm839, %v832, 0.0
      %v930 = vadd.f32 %v928, %v929
      %v931 = vsel %vm839, %v833, 0.0
      %v932 = vadd.f32 %v930, %v931
      %v933 = vsel %vm839, %v834, 0.0
      %v934 = vadd.f32 %v932, %v933
      %v935 = vsel %vm839, %v835, 0.0
      %v936 = vadd.f32 %v934, %v935
      %v937 = vsel %vm839, %v836, 0.0
      %v938 = vadd.f32 %v936, %v937
      %v939 = vsel %vm839, %v837, 0.0
      %v940 = vadd.f32 %v938, %v939
      %v941 = vsel %vm839, %v838, 0.0
      %v942 = vadd.f32 %v940, %v941
      %v943 = vrot.slane %v942, 4
      %v944 = vadd.f32 %v942, %v943
      %v945 = vrot.slane %v944, 2
      %v946 = vadd.f32 %v944, %v945
      %v947 = vrot.slane %v946, 1
      %v948 = vadd.f32 %v946, %v947
      %v949 = vadd.f32 %v879, %v948
      %vm950 = vcmask 57344
      %951 = vst.msk [vmem:[%s3] sm:$0x1] %vm950, %v949
      %v952 = vld [vmem:[%s4] sm:$0x1]
      %v953 = vmul.f32 %v807, %v807
      %v954 = vmul.f32 %v808, %v808
      %v955 = vmul.f32 %v809, %v809
      %v956 = vmul.f32 %v810, %v810
      %v957 = vmul.f32 %v811, %v811
      %v958 = vmul.f32 %v812, %v812
      %v959 = vmul.f32 %v813, %v813
      %v960 = vmul.f32 %v814, %v814
      %v961 = vmul.f32 %v815, %v815
      %v962 = vmul.f32 %v816, %v816
      %v963 = vmul.f32 %v817, %v817
      %v964 = vmul.f32 %v818, %v818
      %v965 = vmul.f32 %v819, %v819
      %v966 = vmul.f32 %v820, %v820
      %v967 = vmul.f32 %v821, %v821
      %v968 = vmul.f32 %v822, %v822
      %v969 = vmul.f32 %v823, %v823
      %v970 = vmul.f32 %v824, %v824
      %v971 = vmul.f32 %v825, %v825
      %v972 = vmul.f32 %v826, %v826
      %v973 = vmul.f32 %v827, %v827
      %v974 = vmul.f32 %v828, %v828
      %v975 = vmul.f32 %v829, %v829
      %v976 = vmul.f32 %v830, %v830
      %v977 = vmul.f32 %v831, %v831
      %v978 = vmul.f32 %v832, %v832
      %v979 = vmul.f32 %v833, %v833
      %v980 = vmul.f32 %v834, %v834
      %v981 = vmul.f32 %v835, %v835
      %v982 = vmul.f32 %v836, %v836
      %v983 = vmul.f32 %v837, %v837
      %v984 = vmul.f32 %v838, %v838
      %v985 = vsel %vm839, %v953, 0.0
      %v986 = vsel %vm839, %v954, 0.0
      %v987 = vadd.f32 %v985, %v986
      %v988 = vsel %vm839, %v955, 0.0
      %v989 = vadd.f32 %v987, %v988
      %v990 = vsel %vm839, %v956, 0.0
      %v991 = vadd.f32 %v989, %v990
      %v992 = vsel %vm839, %v957, 0.0
      %v993 = vadd.f32 %v991, %v992
      %v994 = vsel %vm839, %v958, 0.0
      %v995 = vadd.f32 %v993, %v994
      %v996 = vsel %vm839, %v959, 0.0
      %v997 = vadd.f32 %v995, %v996
      %v998 = vsel %vm839, %v960, 0.0
      %v999 = vadd.f32 %v997, %v998
      %v1000 = vsel %vm839, %v961, 0.0
      %v1001 = vadd.f32 %v999, %v1000
      %v1002 = vsel %vm839, %v962, 0.0
      %v1003 = vadd.f32 %v1001, %v1002
      %v1004 = vsel %vm839, %v963, 0.0
      %v1005 = vadd.f32 %v1003, %v1004
      %v1006 = vsel %vm839, %v964, 0.0
      %v1007 = vadd.f32 %v1005, %v1006
      %v1008 = vsel %vm839, %v965, 0.0
      %v1009 = vadd.f32 %v1007, %v1008
      %v1010 = vsel %vm839, %v966, 0.0
      %v1011 = vadd.f32 %v1009, %v1010
      %v1012 = vsel %vm839, %v967, 0.0
      %v1013 = vadd.f32 %v1011, %v1012
      %v1014 = vsel %vm839, %v968, 0.0
      %v1015 = vadd.f32 %v1013, %v1014
      %v1016 = vsel %vm839, %v969, 0.0
      %v1017 = vadd.f32 %v1015, %v1016
      %v1018 = vsel %vm839, %v970, 0.0
      %v1019 = vadd.f32 %v1017, %v1018
      %v1020 = vsel %vm839, %v971, 0.0
      %v1021 = vadd.f32 %v1019, %v1020
      %v1022 = vsel %vm839, %v972, 0.0
      %v1023 = vadd.f32 %v1021, %v1022
      %v1024 = vsel %vm839, %v973, 0.0
      %v1025 = vadd.f32 %v1023, %v1024
      %v1026 = vsel %vm839, %v974, 0.0
      %v1027 = vadd.f32 %v1025, %v1026
      %v1028 = vsel %vm839, %v975, 0.0
      %v1029 = vadd.f32 %v1027, %v1028
      %v1030 = vsel %vm839, %v976, 0.0
      %v1031 = vadd.f32 %v1029, %v1030
      %v1032 = vsel %vm839, %v977, 0.0
      %v1033 = vadd.f32 %v1031, %v1032
      %v1034 = vsel %vm839, %v978, 0.0
      %v1035 = vadd.f32 %v1033, %v1034
      %v1036 = vsel %vm839, %v979, 0.0
      %v1037 = vadd.f32 %v1035, %v1036
      %v1038 = vsel %vm839, %v980, 0.0
      %v1039 = vadd.f32 %v1037, %v1038
      %v1040 = vsel %vm839, %v981, 0.0
      %v1041 = vadd.f32 %v1039, %v1040
      %v1042 = vsel %vm839, %v982, 0.0
      %v1043 = vadd.f32 %v1041, %v1042
      %v1044 = vsel %vm839, %v983, 0.0
      %v1045 = vadd.f32 %v1043, %v1044
      %v1046 = vsel %vm839, %v984, 0.0
      %v1047 = vadd.f32 %v1045, %v1046
      %v1048 = vrot.slane %v1047, 4
      %v1049 = vadd.f32 %v1047, %v1048
      %v1050 = vrot.slane %v1049, 2
      %v1051 = vadd.f32 %v1049, %v1050
      %v1052 = vrot.slane %v1051, 1
      %v1053 = vadd.f32 %v1051, %v1052
      %v1054 = vadd.f32 %v952, %v1053
      %1055 = vst.msk [vmem:[%s4] sm:$0x1] %vm950, %v1054
      %p1056 = scmp.lt.s32.totalorder %s16, 1
      %s1057 = scalar_select %p1056, %s16, 1
      %s1058 = smul.addr %s1057, 32
      %s1059 = smul.addr %s1058, 8
      %s1060 = scalar_lea.vmem %s2, %s1059
      // Predicated region
      $region33: #{_lambda_.2} parent=27 // pred_check
        %p1061 = pneg %p81
      $region34: #{_lambda_.2} parent=27 // pred_check_branch
        %1063 = sbr.rel (%p1061) target = $region36
      $region35: #{_lambda_.2} parent=27 // pred_region
        _
      $region36: #{_lambda_.2} parent=27 // pred_fallthru
        _
      // Predicated region
      $region37: #{_lambda_.2} parent=27 // pred_check
        %p1064 = pneg %p102
      $region38: #{_lambda_.2} parent=27 // pred_check_branch
        %1066 = sbr.rel (%p1064) target = $region40
      $region39: #{_lambda_.2} parent=27 // pred_region
        _
      $region40: #{_lambda_.2} parent=27 // pred_fallthru
        _
      // Predicated region
      $region41: #{_lambda_.2} parent=27 // pred_check
        %p1067 = pneg %p123
      $region42: #{_lambda_.2} parent=27 // pred_check_branch
        %1069 = sbr.rel (%p1067) target = $region44
      $region43: #{_lambda_.2} parent=27 // pred_region
        _
      $region44: #{_lambda_.2} parent=27 // pred_fallthru
        _
      // Predicated region
      $region45: #{_lambda_.2} parent=27 // pred_check
        %p1070 = pneg %p102
      $region46: #{_lambda_.2} parent=27 // pred_check_branch
        %1072 = sbr.rel (%p1070) target = $region48
      $region47: #{_lambda_.2} parent=27 // pred_region
        _
      $region48: #{_lambda_.2} parent=27 // pred_fallthru
        _
      // Predicated region
      $region49: #{_lambda_.2} parent=27 // pred_check
        %p1073 = pneg %p123
      $region50: #{_lambda_.2} parent=27 // pred_check_branch
        %1075 = sbr.rel (%p1073) target = $region52
      $region51: #{_lambda_.2} parent=27 // pred_region
        _
      $region52: #{_lambda_.2} parent=27 // pred_fallthru
        _
    $region28: #{_lambda_.2} parent=5 // pred_fallthru
      _
    %p1076 = scmp.le.s32.totalorder 2, %s11
    // Predicated region
    $region53: #{_lambda_.2} parent=5 // pred_check
      %p1077 = pneg %p1076
    $region54: #{_lambda_.2} parent=5 // pred_check_branch
      %1079 = sbr.rel (%p1077) target = $region56
    $region55: #{_lambda_.2} parent=5 // pred_region
      %s1080 = ssub.s32 %s11, 2
      // Predicated region
      $region57: #{_lambda_.2} parent=55 // pred_check
        %p1081 = pneg %p87
      $region58: #{_lambda_.2} parent=55 // pred_check_branch
        %1083 = sbr.rel (%p1081) target = $region60
      $region59: #{_lambda_.2} parent=55 // pred_region
        %p1084 = scmp.lt.s32.totalorder %s17, 1
        %s1085 = scalar_select %p1084, %s17, 1
        %s1086 = smul.addr %s1085, 32
        %s1087 = smul.addr %s1086, 8
        %s1088 = scalar_lea.vmem %s2, %s1087
      $region60: #{_lambda_.2} parent=55 // pred_fallthru
        _
    $region56: #{_lambda_.2} parent=5 // pred_fallthru
      _
  $region6: #{_lambda_.2} parent=0 // loop_footer
    %s15 = sadd.s32 1, %s11
  $region7: #{_lambda_.2} parent=0 // loop_footer_branch
    %10 = sbr.rel target = $region3
  $region8: #{_lambda_.2} parent=0 // loop_exit
    _

</llo_original>
